<compile_context>
chip_gen: v6e
topology: v6e:2x2x1
jax: 0.10.0
libtpu: 0.0.40
codegen_flags: <defaults>
</compile_context>

<pallas_src>
import numpy as np
import jax
import jax.numpy as jnp
from jax.experimental import pallas as pl
from jax.experimental.pallas import tpu as pltpu

B = 2                     # batch
N_CLASSES = 4             # n_classes
TEXT_HIDDEN = 768         # distilbert hidden size
IMG_FEAT = 1280           # EfficientNetV2-M pooled feature size
GATED_HIDDEN = 256        # self.gated_output_hidden_size
OUT_PAD = 128             # lane-dense padded output width (>= N_CLASSES)
VOCAB = 100
SEQ = 8
IMG_C, IMG_H, IMG_W = 3, 16, 16


def _round_up(x, m):
    return ((x + m - 1) // m) * m


# ---------------------------------------------------------------------------
# Pallas kernel: gated multimodal fusion head
# ---------------------------------------------------------------------------
def gated_fusion_kernel(img_ref, txt_ref,
                        w_ih_ref, b_ih_ref,
                        w_th_ref, b_th_ref,
                        w_zi_ref, w_zt_ref, b_z_ref,
                        w_fc_ref, b_fc_ref,
                        out_ref):
    # Activations stay f32 in VMEM; cast to bf16 only at the MXU operands.
    img = img_ref[...].astype(jnp.bfloat16)                  # [TM, 1280]
    txt = txt_ref[...].astype(jnp.bfloat16)                  # [TM, 768]

    # image_features_hidden_layer / text_features_hidden_layer (f32 accumulation)
    img_h = jnp.dot(img, w_ih_ref[...], preferred_element_type=jnp.float32) + b_ih_ref[...]
    txt_h = jnp.dot(txt, w_th_ref[...], preferred_element_type=jnp.float32) + b_th_ref[...]

    # hyper_tang_layer (f32 elementwise — EUP)
    img_t = jnp.tanh(img_h)
    txt_t = jnp.tanh(txt_h)

    # z_layer over concat([img_h, txt_h]) without materializing the concat:
    # split weight => two MXU dots accumulating into the same f32 logits.
    z_logits = (jnp.dot(img_h.astype(jnp.bfloat16), w_zi_ref[...],
                        preferred_element_type=jnp.float32)
                + jnp.dot(txt_h.astype(jnp.bfloat16), w_zt_ref[...],
                          preferred_element_type=jnp.float32)
                + b_z_ref[...])

    # softmax over dim=1 (numerically stable; reciprocal goes to the EUP slot)
    z_max = jnp.max(z_logits, axis=1, keepdims=True)
    z_exp = jnp.exp(z_logits - z_max)
    z = z_exp * pl.reciprocal(jnp.sum(z_exp, axis=1, keepdims=True), approx=False)

    # gating (z*img_t + (1-z)*txt_t rewritten to save a mul) + final classifier.
    # Dropout is identity in eval mode.
    gate = txt_t + z * (img_t - txt_t)
    out_ref[...] = (jnp.dot(gate.astype(jnp.bfloat16), w_fc_ref[...],
                            preferred_element_type=jnp.float32)
                    + b_fc_ref[...])                          # [TM, 128] lane-dense


def gated_forward_pallas(image_features, text_features, p):
    """image_features: [B,1280] f32, text_features: [B,768] f32 -> [B,n_classes] f32."""
    bn = image_features.shape[0]
    tm = min(128, _round_up(bn, 8))                 # batch tile (sublane-aligned)
    padded_b = _round_up(bn, tm)
    if padded_b != bn:
        image_features = jnp.pad(image_features, ((0, padded_b - bn), (0, 0)))
        text_features = jnp.pad(text_features, ((0, padded_b - bn), (0, 0)))
    grid = (padded_b // tm,)

    # Activation tiles march along the batch; weights/biases stay resident
    # (index_map returns block 0 for every grid step -> no re-fetch).
    img_spec = pl.BlockSpec((tm, IMG_FEAT), lambda i: (i, 0))
    txt_spec = pl.BlockSpec((tm, TEXT_HIDDEN), lambda i: (i, 0))
    w_ih_spec = pl.BlockSpec((IMG_FEAT, GATED_HIDDEN), lambda i: (0, 0))
    b_ih_spec = pl.BlockSpec((1, GATED_HIDDEN), lambda i: (0, 0))
    w_th_spec = pl.BlockSpec((TEXT_HIDDEN, GATED_HIDDEN), lambda i: (0, 0))
    b_th_spec = pl.BlockSpec((1, GATED_HIDDEN), lambda i: (0, 0))
    w_zi_spec = pl.BlockSpec((GATED_HIDDEN, GATED_HIDDEN), lambda i: (0, 0))
    w_zt_spec = pl.BlockSpec((GATED_HIDDEN, GATED_HIDDEN), lambda i: (0, 0))
    b_z_spec = pl.BlockSpec((1, GATED_HIDDEN), lambda i: (0, 0))
    w_fc_spec = pl.BlockSpec((GATED_HIDDEN, OUT_PAD), lambda i: (0, 0))
    b_fc_spec = pl.BlockSpec((1, OUT_PAD), lambda i: (0, 0))
    out_spec = pl.BlockSpec((tm, OUT_PAD), lambda i: (i, 0))

    weight_bytes = 2 * (IMG_FEAT * GATED_HIDDEN + TEXT_HIDDEN * GATED_HIDDEN
                        + 2 * GATED_HIDDEN * GATED_HIDDEN + GATED_HIDDEN * OUT_PAD)
    act_bytes = 4 * padded_b * (IMG_FEAT + TEXT_HIDDEN + OUT_PAD)
    flops = 2 * padded_b * ((IMG_FEAT + TEXT_HIDDEN + 2 * GATED_HIDDEN) * GATED_HIDDEN
                            + GATED_HIDDEN * OUT_PAD)
    transcendentals = 3 * padded_b * GATED_HIDDEN   # 2x tanh + exp

    out_padded = pl.pallas_call(
        gated_fusion_kernel,
        out_shape=jax.ShapeDtypeStruct((padded_b, OUT_PAD), jnp.float32),
        grid=grid,
        in_specs=[img_spec, txt_spec,
                  w_ih_spec, b_ih_spec,
                  w_th_spec, b_th_spec,
                  w_zi_spec, w_zt_spec, b_z_spec,
                  w_fc_spec, b_fc_spec],
        out_specs=out_spec,
        compiler_params=pltpu.CompilerParams(
            dimension_semantics=("parallel",)),
        cost_estimate=pl.CostEstimate(flops=flops,
                                      transcendentals=transcendentals,
                                      bytes_accessed=weight_bytes + act_bytes),
    )(image_features, text_features,
      p["w_img_hidden_bf16"], p["b_img_hidden"],
      p["w_txt_hidden_bf16"], p["b_txt_hidden"],
      p["w_z_img_bf16"], p["w_z_txt_bf16"], p["b_z"],
      p["w_fc_pad_bf16"], p["b_fc_pad"])

    return out_padded[:bn, :N_CLASSES]


# ---------------------------------------------------------------------------
# Frozen-backbone stand-ins (glue, plain JAX)
# ---------------------------------------------------------------------------
def text_backbone_stub(input_ids, attention_mask, emb_table):
    # TODO(synk): full frozen pretrained DistilBERT encoder is not reproduced here;
    # stand-in deterministically produces the [B, 768] CLS-token feature.
    del attention_mask
    return emb_table[input_ids[:, 0]]


def image_backbone_stub(images, w_stub, b_stub):
    # TODO(synk): full frozen pretrained EfficientNetV2-M backbone is not reproduced;
    # stand-in flattens the NCHW image and projects it to the 1280-d pooled feature.
    flat = images.reshape(images.shape[0], -1)           # [B, C*H*W]
    return jnp.tanh(flat @ w_stub + b_stub)              # [B, 1280]


# ---------------------------------------------------------------------------
# Deterministic parameter construction (synthetic; no checkpoint loading)
# ---------------------------------------------------------------------------
def make_params(key):
    ks = jax.random.split(key, 8)

    def linear(kk, fan_in, fan_out):
        lim = 1.0 / np.sqrt(fan_in)
        w = jax.random.uniform(kk, (fan_in, fan_out), jnp.float32, -lim, lim)
        b = jnp.zeros((1, fan_out), jnp.float32)
        return w, b

    w_ih, b_ih = linear(ks[0], IMG_FEAT, GATED_HIDDEN)            # image_features_hidden_layer
    w_th, b_th = linear(ks[1], TEXT_HIDDEN, GATED_HIDDEN)         # text_features_hidden_layer
    w_z, b_z = linear(ks[2], 2 * GATED_HIDDEN, GATED_HIDDEN)      # z_layer
    w_fc, b_fc = linear(ks[3], GATED_HIDDEN, N_CLASSES)           # fc_layer_gated

    # Kernel-side copies: bf16 weights (half the DMA), split z weight,
    # zero-padded lane-dense classifier weight/bias.
    w_fc_pad = jnp.zeros((GATED_HIDDEN, OUT_PAD), jnp.float32).at[:, :N_CLASSES].set(w_fc)
    b_fc_pad = jnp.zeros((1, OUT_PAD), jnp.float32).at[:, :N_CLASSES].set(b_fc)

    emb_table = 0.02 * jax.random.normal(ks[4], (VOCAB, TEXT_HIDDEN), jnp.float32)
    w_stub = 0.02 * jax.random.normal(ks[5], (IMG_C * IMG_H * IMG_W, IMG_FEAT), jnp.float32)
    b_stub = jnp.zeros((IMG_FEAT,), jnp.float32)

    return dict(
        # f32 originals (for the reference computation)
        w_img_hidden=w_ih, b_img_hidden=b_ih,
        w_txt_hidden=w_th, b_txt_hidden=b_th,
        w_z=w_z, b_z=b_z,
        w_fc=w_fc, b_fc=b_fc,
        # kernel-side bf16 / padded copies
        w_img_hidden_bf16=w_ih.astype(jnp.bfloat16),
        w_txt_hidden_bf16=w_th.astype(jnp.bfloat16),
        w_z_img_bf16=w_z[:GATED_HIDDEN].astype(jnp.bfloat16),
        w_z_txt_bf16=w_z[GATED_HIDDEN:].astype(jnp.bfloat16),
        w_fc_pad_bf16=w_fc_pad.astype(jnp.bfloat16),
        b_fc_pad=b_fc_pad,
        # backbone stubs
        emb_table=emb_table, w_img_stub=w_stub, b_img_stub=b_stub,
    )


# ---------------------------------------------------------------------------
# References
# ---------------------------------------------------------------------------
def reference_head_f32(image_features, text_features, p):
    """PyTorch-faithful full-f32 reference (semantics check, loose tolerance)."""
    img_h = image_features @ p["w_img_hidden"] + p["b_img_hidden"]
    txt_h = text_features @ p["w_txt_hidden"] + p["b_txt_hidden"]
    z = jax.nn.softmax(jnp.concatenate([img_h, txt_h], axis=1) @ p["w_z"] + p["b_z"], axis=1)
    gate = z * jnp.tanh(img_h) + (1.0 - z) * jnp.tanh(txt_h)
    return gate @ p["w_fc"] + p["b_fc"]


def reference_head_bf16(image_features, text_features, p):
    """Mirror of the kernel's bf16-operand / f32-accumulate arithmetic (tight tolerance)."""
    def mm(a, w):
        return jnp.dot(a.astype(jnp.bfloat16), w, preferred_element_type=jnp.float32)
    img_h = mm(image_features, p["w_img_hidden_bf16"]) + p["b_img_hidden"]
    txt_h = mm(text_features, p["w_txt_hidden_bf16"]) + p["b_txt_hidden"]
    z_logits = mm(img_h, p["w_z_img_bf16"]) + mm(txt_h, p["w_z_txt_bf16"]) + p["b_z"]
    z = jax.nn.softmax(z_logits, axis=1)
    gate = jnp.tanh(txt_h) + z * (jnp.tanh(img_h) - jnp.tanh(txt_h))
    return (mm(gate, p["w_fc_pad_bf16"]) + p["b_fc_pad"])[:, :N_CLASSES]


if __name__ == "__main__":
    key = jax.random.PRNGKey(0)
    k_ids, k_img, k_par = jax.random.split(key, 3)

    input_ids = jax.random.randint(k_ids, (B, SEQ), 0, VOCAB, dtype=jnp.int32)
    attention_mask = jnp.ones((B, SEQ), jnp.int32)
    images = jax.random.normal(k_img, (B, IMG_C, IMG_H, IMG_W), jnp.float32)  # NCHW

    params = make_params(k_par)

    # frozen-backbone stand-ins (glue)
    text_features = text_backbone_stub(input_ids, attention_mask, params["emb_table"])
    image_features = image_backbone_stub(images, params["w_img_stub"], params["b_img_stub"])

    # gated fusion head in Pallas
    out = gated_forward_pallas(image_features, text_features, params)
    out = jax.block_until_ready(out)
    assert out.shape == (B, N_CLASSES)

    # Tight check vs a reference that uses the same bf16 MXU operands.
    ref_bf16 = reference_head_bf16(image_features, text_features, params)
    np.testing.assert_allclose(np.asarray(out), np.asarray(ref_bf16), rtol=1e-4, atol=1e-4)

    # Loose semantics check vs the PyTorch-faithful f32 math (bf16 weight rounding only).
    ref_f32 = reference_head_f32(image_features, text_features, params)
    np.testing.assert_allclose(np.asarray(out), np.asarray(ref_f32), rtol=5e-2, atol=5e-2)

    print("KERNEL_OK")
</pallas_src>

<mosaic_0001>
module attributes {stable_mosaic.version = 11 : i64} {
  func.func @gated_fusion_kernel(%arg0: i32, %arg1: memref<8x1280xf32, #tpu.memory_space<vmem>>, %arg2: memref<8x768xf32, #tpu.memory_space<vmem>>, %arg3: memref<1280x256xbf16, #tpu.memory_space<vmem>>, %arg4: memref<1x256xf32, #tpu.memory_space<vmem>>, %arg5: memref<768x256xbf16, #tpu.memory_space<vmem>>, %arg6: memref<1x256xf32, #tpu.memory_space<vmem>>, %arg7: memref<256x256xbf16, #tpu.memory_space<vmem>>, %arg8: memref<256x256xbf16, #tpu.memory_space<vmem>>, %arg9: memref<1x256xf32, #tpu.memory_space<vmem>>, %arg10: memref<256x128xbf16, #tpu.memory_space<vmem>>, %arg11: memref<1x128xf32, #tpu.memory_space<vmem>>, %arg12: memref<8x128xf32, #tpu.memory_space<vmem>>) attributes {dimension_semantics = [#tpu.dimension_semantics<parallel>], iteration_bounds = array<i64: 1>, scalar_prefetch = 0 : i64, scratch_operands = 0 : i64, tpu.core_type = #tpu.core_type<tc>, window_params = [{transform_indices = @transform_0, window_bounds = array<i64: 8, 1280>}, {transform_indices = @transform_1, window_bounds = array<i64: 8, 768>}, {pipeline_mode = #tpu.pipeline_mode<synchronous>, transform_indices = @transform_2, window_bounds = array<i64: 1280, 256>}, {pipeline_mode = #tpu.pipeline_mode<synchronous>, transform_indices = @transform_3, window_bounds = array<i64: 1, 256>}, {pipeline_mode = #tpu.pipeline_mode<synchronous>, transform_indices = @transform_4, window_bounds = array<i64: 768, 256>}, {pipeline_mode = #tpu.pipeline_mode<synchronous>, transform_indices = @transform_5, window_bounds = array<i64: 1, 256>}, {pipeline_mode = #tpu.pipeline_mode<synchronous>, transform_indices = @transform_6, window_bounds = array<i64: 256, 256>}, {pipeline_mode = #tpu.pipeline_mode<synchronous>, transform_indices = @transform_7, window_bounds = array<i64: 256, 256>}, {pipeline_mode = #tpu.pipeline_mode<synchronous>, transform_indices = @transform_8, window_bounds = array<i64: 1, 256>}, {pipeline_mode = #tpu.pipeline_mode<synchronous>, transform_indices = @transform_9, window_bounds = array<i64: 256, 128>}, {pipeline_mode = #tpu.pipeline_mode<synchronous>, transform_indices = @transform_10, window_bounds = array<i64: 1, 128>}, {transform_indices = @transform_11, window_bounds = array<i64: 8, 128>}]} {
    %c0 = arith.constant 0 : index
    %c0_0 = arith.constant 0 : index
    %0 = vector.load %arg1[%c0, %c0_0] : memref<8x1280xf32, #tpu.memory_space<vmem>>, vector<8x1280xf32>
    %1 = arith.truncf %0 : vector<8x1280xf32> to vector<8x1280xbf16>
    %c0_1 = arith.constant 0 : index
    %c0_2 = arith.constant 0 : index
    %2 = vector.load %arg2[%c0_1, %c0_2] : memref<8x768xf32, #tpu.memory_space<vmem>>, vector<8x768xf32>
    %3 = arith.truncf %2 : vector<8x768xf32> to vector<8x768xbf16>
    %c0_3 = arith.constant 0 : index
    %c0_4 = arith.constant 0 : index
    %4 = vector.load %arg3[%c0_3, %c0_4] : memref<1280x256xbf16, #tpu.memory_space<vmem>>, vector<1280x256xbf16>
    %cst = arith.constant dense<0.000000e+00> : vector<8x256xf32>
    %5 = tpu.matmul %1, %4, %cst {dimension_numbers = #tpu.dot_dimension_numbers<[1], [0], [0], [1], [0, 0, 1, 1], [], []>} : vector<8x1280xbf16>, vector<1280x256xbf16>, vector<8x256xf32> -> vector<8x256xf32>
    %c0_5 = arith.constant 0 : index
    %c0_6 = arith.constant 0 : index
    %6 = vector.load %arg4[%c0_5, %c0_6] : memref<1x256xf32, #tpu.memory_space<vmem>>, vector<1x256xf32>
    %7 = vector.broadcast %6 : vector<1x256xf32> to vector<8x256xf32>
    %8 = arith.addf %5, %7 : vector<8x256xf32>
    %c0_7 = arith.constant 0 : index
    %c0_8 = arith.constant 0 : index
    %9 = vector.load %arg5[%c0_7, %c0_8] : memref<768x256xbf16, #tpu.memory_space<vmem>>, vector<768x256xbf16>
    %cst_9 = arith.constant dense<0.000000e+00> : vector<8x256xf32>
    %10 = tpu.matmul %3, %9, %cst_9 {dimension_numbers = #tpu.dot_dimension_numbers<[1], [0], [0], [1], [0, 0, 1, 1], [], []>} : vector<8x768xbf16>, vector<768x256xbf16>, vector<8x256xf32> -> vector<8x256xf32>
    %c0_10 = arith.constant 0 : index
    %c0_11 = arith.constant 0 : index
    %11 = vector.load %arg6[%c0_10, %c0_11] : memref<1x256xf32, #tpu.memory_space<vmem>>, vector<1x256xf32>
    %12 = vector.broadcast %11 : vector<1x256xf32> to vector<8x256xf32>
    %13 = arith.addf %10, %12 : vector<8x256xf32>
    %14 = math.tanh %8 : vector<8x256xf32>
    %15 = math.tanh %13 : vector<8x256xf32>
    %16 = arith.truncf %8 : vector<8x256xf32> to vector<8x256xbf16>
    %c0_12 = arith.constant 0 : index
    %c0_13 = arith.constant 0 : index
    %17 = vector.load %arg7[%c0_12, %c0_13] : memref<256x256xbf16, #tpu.memory_space<vmem>>, vector<256x256xbf16>
    %cst_14 = arith.constant dense<0.000000e+00> : vector<8x256xf32>
    %18 = tpu.matmul %16, %17, %cst_14 {dimension_numbers = #tpu.dot_dimension_numbers<[1], [0], [0], [1], [0, 0, 1, 1], [], []>} : vector<8x256xbf16>, vector<256x256xbf16>, vector<8x256xf32> -> vector<8x256xf32>
    %19 = arith.truncf %13 : vector<8x256xf32> to vector<8x256xbf16>
    %c0_15 = arith.constant 0 : index
    %c0_16 = arith.constant 0 : index
    %20 = vector.load %arg8[%c0_15, %c0_16] : memref<256x256xbf16, #tpu.memory_space<vmem>>, vector<256x256xbf16>
    %cst_17 = arith.constant dense<0.000000e+00> : vector<8x256xf32>
    %21 = tpu.matmul %19, %20, %cst_17 {dimension_numbers = #tpu.dot_dimension_numbers<[1], [0], [0], [1], [0, 0, 1, 1], [], []>} : vector<8x256xbf16>, vector<256x256xbf16>, vector<8x256xf32> -> vector<8x256xf32>
    %22 = arith.addf %18, %21 : vector<8x256xf32>
    %c0_18 = arith.constant 0 : index
    %c0_19 = arith.constant 0 : index
    %23 = vector.load %arg9[%c0_18, %c0_19] : memref<1x256xf32, #tpu.memory_space<vmem>>, vector<1x256xf32>
    %24 = vector.broadcast %23 : vector<1x256xf32> to vector<8x256xf32>
    %25 = arith.addf %22, %24 : vector<8x256xf32>
    %cst_20 = arith.constant dense<0xFF800000> : vector<8xf32>
    %26 = vector.multi_reduction <maximumf>, %25, %cst_20 [1] : vector<8x256xf32> to vector<8xf32>
    %27 = vector.shape_cast %26 : vector<8xf32> to vector<8x1xf32>
    %28 = vector.broadcast %27 : vector<8x1xf32> to vector<8x256xf32>
    %29 = arith.subf %25, %28 : vector<8x256xf32>
    %30 = math.exp %29 : vector<8x256xf32>
    %cst_21 = arith.constant dense<0.000000e+00> : vector<8xf32>
    %31 = vector.multi_reduction <add>, %30, %cst_21 [1] : vector<8x256xf32> to vector<8xf32>
    %32 = vector.shape_cast %31 : vector<8xf32> to vector<8x1xf32>
    %33 = tpu.reciprocal %32 : vector<8x1xf32> -> vector<8x1xf32>
    %34 = vector.broadcast %33 : vector<8x1xf32> to vector<8x256xf32>
    %35 = arith.mulf %30, %34 : vector<8x256xf32>
    %36 = arith.subf %14, %15 : vector<8x256xf32>
    %37 = arith.mulf %35, %36 : vector<8x256xf32>
    %38 = arith.addf %15, %37 : vector<8x256xf32>
    %39 = arith.truncf %38 : vector<8x256xf32> to vector<8x256xbf16>
    %c0_22 = arith.constant 0 : index
    %c0_23 = arith.constant 0 : index
    %40 = vector.load %arg10[%c0_22, %c0_23] : memref<256x128xbf16, #tpu.memory_space<vmem>>, vector<256x128xbf16>
    %cst_24 = arith.constant dense<0.000000e+00> : vector<8x128xf32>
    %41 = tpu.matmul %39, %40, %cst_24 {dimension_numbers = #tpu.dot_dimension_numbers<[1], [0], [0], [1], [0, 0, 1, 1], [], []>} : vector<8x256xbf16>, vector<256x128xbf16>, vector<8x128xf32> -> vector<8x128xf32>
    %c0_25 = arith.constant 0 : index
    %c0_26 = arith.constant 0 : index
    %42 = vector.load %arg11[%c0_25, %c0_26] : memref<1x128xf32, #tpu.memory_space<vmem>>, vector<1x128xf32>
    %43 = vector.broadcast %42 : vector<1x128xf32> to vector<8x128xf32>
    %44 = arith.addf %41, %43 : vector<8x128xf32>
    %c0_27 = arith.constant 0 : index
    %c0_28 = arith.constant 0 : index
    %45 = vector.load %arg12[%c0_27, %c0_28] : memref<8x128xf32, #tpu.memory_space<vmem>>, vector<8x128xf32>
    tpu.vector_store %arg12[%c0_27, %c0_28], %44 {strides = array<i32>} : memref<8x128xf32, #tpu.memory_space<vmem>>, vector<8x128xf32>,
    return
  }
  func.func @transform_0(%arg0: i32) -> (i32, i32) {
    %c0_i32 = arith.constant 0 : i32
    %c0_i32_0 = arith.constant 0 : i32
    return %arg0, %c0_i32 : i32, i32
  }
  func.func @transform_1(%arg0: i32) -> (i32, i32) {
    %c0_i32 = arith.constant 0 : i32
    %c0_i32_0 = arith.constant 0 : i32
    return %arg0, %c0_i32 : i32, i32
  }
  func.func @transform_2(%arg0: i32) -> (i32, i32) {
    %c0_i32 = arith.constant 0 : i32
    %c0_i32_0 = arith.constant 0 : i32
    %c0_i32_1 = arith.constant 0 : i32
    return %c0_i32, %c0_i32_0 : i32, i32
  }
  func.func @transform_3(%arg0: i32) -> (i32, i32) {
    %c0_i32 = arith.constant 0 : i32
    %c0_i32_0 = arith.constant 0 : i32
    %c0_i32_1 = arith.constant 0 : i32
    return %c0_i32, %c0_i32_0 : i32, i32
  }
  func.func @transform_4(%arg0: i32) -> (i32, i32) {
    %c0_i32 = arith.constant 0 : i32
    %c0_i32_0 = arith.constant 0 : i32
    %c0_i32_1 = arith.constant 0 : i32
    return %c0_i32, %c0_i32_0 : i32, i32
  }
  func.func @transform_5(%arg0: i32) -> (i32, i32) {
    %c0_i32 = arith.constant 0 : i32
    %c0_i32_0 = arith.constant 0 : i32
    %c0_i32_1 = arith.constant 0 : i32
    return %c0_i32, %c0_i32_0 : i32, i32
  }
  func.func @transform_6(%arg0: i32) -> (i32, i32) {
    %c0_i32 = arith.constant 0 : i32
    %c0_i32_0 = arith.constant 0 : i32
    %c0_i32_1 = arith.constant 0 : i32
    return %c0_i32, %c0_i32_0 : i32, i32
  }
  func.func @transform_7(%arg0: i32) -> (i32, i32) {
    %c0_i32 = arith.constant 0 : i32
    %c0_i32_0 = arith.constant 0 : i32
    %c0_i32_1 = arith.constant 0 : i32
    return %c0_i32, %c0_i32_0 : i32, i32
  }
  func.func @transform_8(%arg0: i32) -> (i32, i32) {
    %c0_i32 = arith.constant 0 : i32
    %c0_i32_0 = arith.constant 0 : i32
    %c0_i32_1 = arith.constant 0 : i32
    return %c0_i32, %c0_i32_0 : i32, i32
  }
  func.func @transform_9(%arg0: i32) -> (i32, i32) {
    %c0_i32 = arith.constant 0 : i32
    %c0_i32_0 = arith.constant 0 : i32
    %c0_i32_1 = arith.constant 0 : i32
    return %c0_i32, %c0_i32_0 : i32, i32
  }
  func.func @transform_10(%arg0: i32) -> (i32, i32) {
    %c0_i32 = arith.constant 0 : i32
    %c0_i32_0 = arith.constant 0 : i32
    %c0_i32_1 = arith.constant 0 : i32
    return %c0_i32, %c0_i32_0 : i32, i32
  }
  func.func @transform_11(%arg0: i32) -> (i32, i32) {
    %c0_i32 = arith.constant 0 : i32
    %c0_i32_0 = arith.constant 0 : i32
    return %arg0, %c0_i32 : i32, i32
  }
}

</mosaic_0001>

<llo_original>
// kernel: tpu_custom_call.1
$region0: #{tpu_custom_call.1}
  #allocation0 [shape = 'u32[]', space=smem, size = 0x4, offset = 0x4, fixed_abs, tag = 'smem constant byte address 0x4 - core index']
  #allocation1 [shape = 'u32[144,128]{1,0:T(1,128)}', space=vmem, size = 0x12000, scoped, tag = 'internal scratch']
  %s0 = inlined_call_operand.hbm [shape: f32[8,1280], index: 0, kind: input, shape index: {}]
  %s1 = inlined_call_operand.hbm [shape: f32[8,768], index: 1, kind: input, shape index: {}]
  %s2 = inlined_call_operand.hbm [shape: bf16[1280,256], index: 2, kind: input, shape index: {}]
  %s3 = inlined_call_operand.vmem [shape: f32[1,256], index: 3, kind: input, shape index: {}]
  %s4 = inlined_call_operand.hbm [shape: bf16[768,256], index: 4, kind: input, shape index: {}]
  %s5 = inlined_call_operand.vmem [shape: f32[1,256], index: 5, kind: input, shape index: {}]
  %s6 = inlined_call_operand.hbm [shape: bf16[256,256], index: 6, kind: input, shape index: {}]
  %s7 = inlined_call_operand.hbm [shape: bf16[256,256], index: 7, kind: input, shape index: {}]
  %s8 = inlined_call_operand.vmem [shape: f32[1,256], index: 8, kind: input, shape index: {}]
  %s9 = inlined_call_operand.hbm [shape: bf16[256,128], index: 9, kind: input, shape index: {}]
  %s10 = inlined_call_operand.vmem [shape: f32[1,128], index: 10, kind: input, shape index: {}]
  %s11 = inlined_call_operand.hbm [shape: f32[8,128], index: 11, kind: output, shape index: {}]
  %s12 = sld [smem:[#allocation0]]
  $region82: #{tpu_custom_call.1} parent=0
    _
  %s14 = ssub.s32 1, %s12
  %s15 = scalar_select 0, %s14, %s12
  $region1: #{tpu_custom_call.1} parent=0
    #allocation2 [shape = 'u8[40960]{0}', space=vmem, size = 0xa000, scoped, tag = 'input window, operand 0, single buffered']
    #allocation3 [shape = 's32[1]{0}', space=sflag, size = 0x4, scoped, tag = 'scoped memory for tpu_custom_call.1']
    #allocation4 [shape = 's32[1]{0}', space=sflag, size = 0x4, scoped, tag = 'scoped memory for tpu_custom_call.1']
    #allocation5 [shape = 'u8[24576]{0}', space=vmem, size = 0x6000, scoped, tag = 'input window, operand 1, single buffered']
    #allocation6 [shape = 's32[1]{0}', space=sflag, size = 0x4, scoped, tag = 'scoped memory for tpu_custom_call.1']
    #allocation7 [shape = 'u8[655360]{0}', space=vmem, size = 0xa0000, scoped, tag = 'input window, operand 2, single buffered']
    #allocation8 [shape = 'u8[393216]{0}', space=vmem, size = 0x60000, scoped, tag = 'input window, operand 4, single buffered']
    #allocation9 [shape = 's32[1]{0}', space=sflag, size = 0x4, scoped, tag = 'scoped memory for tpu_custom_call.1']
    #allocation10 [shape = 'u8[131072]{0}', space=vmem, size = 0x20000, scoped, tag = 'input window, operand 6, single buffered']
    #allocation11 [shape = 'u8[131072]{0}', space=vmem, size = 0x20000, scoped, tag = 'input window, operand 7, single buffered']
    #allocation12 [shape = 's32[1]{0}', space=sflag, size = 0x4, scoped, tag = 'scoped memory for tpu_custom_call.1']
    #allocation13 [shape = 'u8[65536]{0}', space=vmem, size = 0x10000, scoped, tag = 'input window, operand 9, single buffered']
    #allocation14 [shape = 'u8[4096]{0}', space=vmem, size = 0x1000, scoped, tag = 'output window, operand 0, single buffered']
    %16 = vsyncpa [#allocation3], 0
    %17 = vsyncpa [#allocation6], 0
    %18 = vsyncpa [#allocation9], 0
    %19 = vsyncpa [#allocation12], 0
    %20 = vsyncpa [#allocation4], 0
    // Predicated region
    $region2: #{tpu_custom_call.1} parent=1 // pred_check
      _
    $region3: #{tpu_custom_call.1} parent=1 // pred_check_branch
      %22 = sbr.rel (0) target = $region5
    $region4: #{tpu_custom_call.1} parent=1 // pred_region
      %s24 = ssub.s32 1280, 1280
      %25 = vsyncadd [#allocation3], %s24
      %s27 = sshll.u32 [#allocation2], 4
      %s28 = int_to_ptr.vmem [resolvable:$true] %s27
      %30 = dma.hbm_to_vmem [thread:$0]  %s0, 1280, %s28, [#allocation3]
    $region5: #{tpu_custom_call.1} parent=1 // pred_fallthru
      _
    // Predicated region
    $region6: #{tpu_custom_call.1} parent=1 // pred_check
      _
    $region7: #{tpu_custom_call.1} parent=1 // pred_check_branch
      %32 = sbr.rel (0) target = $region9
    $region8: #{tpu_custom_call.1} parent=1 // pred_region
      %s34 = ssub.s32 768, 768
      %35 = vsyncadd [#allocation6], %s34
      %s37 = sshll.u32 [#allocation5], 4
      %s38 = int_to_ptr.vmem [resolvable:$true] %s37
      %40 = dma.hbm_to_vmem [thread:$0]  %s1, 768, %s38, [#allocation6]
    $region9: #{tpu_custom_call.1} parent=1 // pred_fallthru
      _
    // Predicated region
    $region10: #{tpu_custom_call.1} parent=1 // pred_check
      _
    $region11: #{tpu_custom_call.1} parent=1 // pred_check_branch
      %42 = sbr.rel (0) target = $region13
    $region12: #{tpu_custom_call.1} parent=1 // pred_region
      %s44 = ssub.s32 20480, 20480
      %45 = vsyncadd [#allocation6], %s44
      %s46 = sshll.u32 [#allocation7], 4
      %s47 = int_to_ptr.vmem [resolvable:$true] %s46
      %52 = dma.hbm_to_vmem [thread:$0]  %s2, 20480, %s47, [#allocation6], 128, 128, 8
    $region13: #{tpu_custom_call.1} parent=1 // pred_fallthru
      _
    // Predicated region
    $region14: #{tpu_custom_call.1} parent=1 // pred_check
      _
    $region15: #{tpu_custom_call.1} parent=1 // pred_check_branch
      %54 = sbr.rel (0) target = $region17
    $region16: #{tpu_custom_call.1} parent=1 // pred_region
      _
    $region17: #{tpu_custom_call.1} parent=1 // pred_fallthru
      _
    // Predicated region
    $region18: #{tpu_custom_call.1} parent=1 // pred_check
      _
    $region19: #{tpu_custom_call.1} parent=1 // pred_check_branch
      %56 = sbr.rel (0) target = $region21
    $region20: #{tpu_custom_call.1} parent=1 // pred_region
      %s58 = ssub.s32 12288, 12288
      %59 = vsyncadd [#allocation9], %s58
      %s60 = sshll.u32 [#allocation8], 4
      %s61 = int_to_ptr.vmem [resolvable:$true] %s60
      %66 = dma.hbm_to_vmem [thread:$0]  %s4, 12288, %s61, [#allocation9], 128, 128, 8
    $region21: #{tpu_custom_call.1} parent=1 // pred_fallthru
      _
    // Predicated region
    $region22: #{tpu_custom_call.1} parent=1 // pred_check
      _
    $region23: #{tpu_custom_call.1} parent=1 // pred_check_branch
      %68 = sbr.rel (0) target = $region25
    $region24: #{tpu_custom_call.1} parent=1 // pred_region
      _
    $region25: #{tpu_custom_call.1} parent=1 // pred_fallthru
      _
    // Predicated region
    $region26: #{tpu_custom_call.1} parent=1 // pred_check
      _
    $region27: #{tpu_custom_call.1} parent=1 // pred_check_branch
      %70 = sbr.rel (0) target = $region29
    $region28: #{tpu_custom_call.1} parent=1 // pred_region
      %s72 = ssub.s32 4096, 4096
      %73 = vsyncadd [#allocation9], %s72
      %s74 = sshll.u32 [#allocation10], 4
      %s75 = int_to_ptr.vmem [resolvable:$true] %s74
      %80 = dma.hbm_to_vmem [thread:$0]  %s6, 4096, %s75, [#allocation9], 128, 128, 8
    $region29: #{tpu_custom_call.1} parent=1 // pred_fallthru
      _
    // Predicated region
    $region30: #{tpu_custom_call.1} parent=1 // pred_check
      _
    $region31: #{tpu_custom_call.1} parent=1 // pred_check_branch
      %82 = sbr.rel (0) target = $region33
    $region32: #{tpu_custom_call.1} parent=1 // pred_region
      %s84 = ssub.s32 4096, 4096
      %85 = vsyncadd [#allocation12], %s84
      %s86 = sshll.u32 [#allocation11], 4
      %s87 = int_to_ptr.vmem [resolvable:$true] %s86
      %92 = dma.hbm_to_vmem [thread:$0]  %s7, 4096, %s87, [#allocation12], 128, 128, 8
    $region33: #{tpu_custom_call.1} parent=1 // pred_fallthru
      _
    // Predicated region
    $region34: #{tpu_custom_call.1} parent=1 // pred_check
      _
    $region35: #{tpu_custom_call.1} parent=1 // pred_check_branch
      %94 = sbr.rel (0) target = $region37
    $region36: #{tpu_custom_call.1} parent=1 // pred_region
      _
    $region37: #{tpu_custom_call.1} parent=1 // pred_fallthru
      _
    // Predicated region
    $region38: #{tpu_custom_call.1} parent=1 // pred_check
      _
    $region39: #{tpu_custom_call.1} parent=1 // pred_check_branch
      %96 = sbr.rel (0) target = $region41
    $region40: #{tpu_custom_call.1} parent=1 // pred_region
      %s98 = ssub.s32 2048, 2048
      %99 = vsyncadd [#allocation12], %s98
      %s100 = sshll.u32 [#allocation13], 4
      %s101 = int_to_ptr.vmem [resolvable:$true] %s100
      %106 = dma.hbm_to_vmem [thread:$0]  %s9, 2048, %s101, [#allocation12], 64, 64, 4
    $region41: #{tpu_custom_call.1} parent=1 // pred_fallthru
      _
    // Predicated region
    $region42: #{tpu_custom_call.1} parent=1 // pred_check
      _
    $region43: #{tpu_custom_call.1} parent=1 // pred_check_branch
      %108 = sbr.rel (0) target = $region45
    $region44: #{tpu_custom_call.1} parent=1 // pred_region
      _
    $region45: #{tpu_custom_call.1} parent=1 // pred_fallthru
      _
    // Predicated region
    $region46: #{tpu_custom_call.1} parent=1 // pred_check
      _
    $region47: #{tpu_custom_call.1} parent=1 // pred_check_branch
      %110 = sbr.rel (0) target = $region49
    $region48: #{tpu_custom_call.1} parent=1 // pred_region
      %111 = dma.done [#allocation3], 1280
    $region49: #{tpu_custom_call.1} parent=1 // pred_fallthru
      _
    // Predicated region
    $region50: #{tpu_custom_call.1} parent=1 // pred_check
      _
    $region51: #{tpu_custom_call.1} parent=1 // pred_check_branch
      %113 = sbr.rel (0) target = $region53
    $region52: #{tpu_custom_call.1} parent=1 // pred_region
      %114 = dma.done [#allocation6], 768
    $region53: #{tpu_custom_call.1} parent=1 // pred_fallthru
      _
    // Predicated region
    $region54: #{tpu_custom_call.1} parent=1 // pred_check
      _
    $region55: #{tpu_custom_call.1} parent=1 // pred_check_branch
      %116 = sbr.rel (0) target = $region57
    $region56: #{tpu_custom_call.1} parent=1 // pred_region
      %117 = dma.done [#allocation6], 20480
    $region57: #{tpu_custom_call.1} parent=1 // pred_fallthru
      _
    // Predicated region
    $region58: #{tpu_custom_call.1} parent=1 // pred_check
      _
    $region59: #{tpu_custom_call.1} parent=1 // pred_check_branch
      %119 = sbr.rel (0) target = $region61
    $region60: #{tpu_custom_call.1} parent=1 // pred_region
      %120 = dma.done [#allocation9], 12288
    $region61: #{tpu_custom_call.1} parent=1 // pred_fallthru
      _
    // Predicated region
    $region62: #{tpu_custom_call.1} parent=1 // pred_check
      _
    $region63: #{tpu_custom_call.1} parent=1 // pred_check_branch
      %122 = sbr.rel (0) target = $region65
    $region64: #{tpu_custom_call.1} parent=1 // pred_region
      %123 = dma.done [#allocation9], 4096
    $region65: #{tpu_custom_call.1} parent=1 // pred_fallthru
      _
    // Predicated region
    $region66: #{tpu_custom_call.1} parent=1 // pred_check
      _
    $region67: #{tpu_custom_call.1} parent=1 // pred_check_branch
      %125 = sbr.rel (0) target = $region69
    $region68: #{tpu_custom_call.1} parent=1 // pred_region
      %126 = dma.done [#allocation12], 4096
    $region69: #{tpu_custom_call.1} parent=1 // pred_fallthru
      _
    // Predicated region
    $region70: #{tpu_custom_call.1} parent=1 // pred_check
      _
    $region71: #{tpu_custom_call.1} parent=1 // pred_check_branch
      %128 = sbr.rel (0) target = $region73
    $region72: #{tpu_custom_call.1} parent=1 // pred_region
      %129 = dma.done [#allocation12], 2048
    $region73: #{tpu_custom_call.1} parent=1 // pred_fallthru
      _
    %v131 = vld [vmem:[#allocation2] sm:$0xff]
    %v132 = vld [vmem:[#allocation2 + $0x8] sm:$0xff]
    %v133 = vld [vmem:[#allocation2 + $0x10] sm:$0xff]
    %v134 = vld [vmem:[#allocation2 + $0x18] sm:$0xff]
    %v135 = vld [vmem:[#allocation2 + $0x20] sm:$0xff]
    %v136 = vld [vmem:[#allocation2 + $0x28] sm:$0xff]
    %v137 = vld [vmem:[#allocation2 + $0x30] sm:$0xff]
    %v138 = vld [vmem:[#allocation2 + $0x38] sm:$0xff]
    %v139 = vld [vmem:[#allocation2 + $0x40] sm:$0xff]
    %v140 = vld [vmem:[#allocation2 + $0x48] sm:$0xff]
    %v141 = vpack.c.bf16 %v131, %v131
    %v142 = vpack.c.bf16 %v132, %v132
    %v143 = vpack.c.bf16 %v133, %v133
    %v144 = vpack.c.bf16 %v134, %v134
    %v145 = vpack.c.bf16 %v135, %v135
    %v146 = vpack.c.bf16 %v136, %v136
    %v147 = vpack.c.bf16 %v137, %v137
    %v148 = vpack.c.bf16 %v138, %v138
    %v149 = vpack.c.bf16 %v139, %v139
    %v150 = vpack.c.bf16 %v140, %v140
    %v151 = vld [vmem:[#allocation5] sm:$0xff]
    %v152 = vld [vmem:[#allocation5 + $0x8] sm:$0xff]
    %v153 = vld [vmem:[#allocation5 + $0x10] sm:$0xff]
    %v154 = vld [vmem:[#allocation5 + $0x18] sm:$0xff]
    %v155 = vld [vmem:[#allocation5 + $0x20] sm:$0xff]
    %v156 = vld [vmem:[#allocation5 + $0x28] sm:$0xff]
    %v157 = vpack.c.bf16 %v151, %v151
    %v158 = vpack.c.bf16 %v152, %v152
    %v159 = vpack.c.bf16 %v153, %v153
    %v160 = vpack.c.bf16 %v154, %v154
    %v161 = vpack.c.bf16 %v155, %v155
    %v162 = vpack.c.bf16 %v156, %v156
    %v163 = vld [vmem:[#allocation7] sm:$0xff]
    %v164 = vld [vmem:[#allocation7 + $0x8] sm:$0xff]
    %v165 = vld [vmem:[#allocation7 + $0x10] sm:$0xff]
    %v166 = vld [vmem:[#allocation7 + $0x18] sm:$0xff]
    %v167 = vld [vmem:[#allocation7 + $0x20] sm:$0xff]
    %v168 = vld [vmem:[#allocation7 + $0x28] sm:$0xff]
    %v169 = vld [vmem:[#allocation7 + $0x30] sm:$0xff]
    %v170 = vld [vmem:[#allocation7 + $0x38] sm:$0xff]
    %v171 = vld [vmem:[#allocation7 + $0x40] sm:$0xff]
    %v172 = vld [vmem:[#allocation7 + $0x48] sm:$0xff]
    %v173 = vld [vmem:[#allocation7 + $0x50] sm:$0xff]
    %v174 = vld [vmem:[#allocation7 + $0x58] sm:$0xff]
    %v175 = vld [vmem:[#allocation7 + $0x60] sm:$0xff]
    %v176 = vld [vmem:[#allocation7 + $0x68] sm:$0xff]
    %v177 = vld [vmem:[#allocation7 + $0x70] sm:$0xff]
    %v178 = vld [vmem:[#allocation7 + $0x78] sm:$0xff]
    %v179 = vld [vmem:[#allocation7 + $0x80] sm:$0xff]
    %v180 = vld [vmem:[#allocation7 + $0x88] sm:$0xff]
    %v181 = vld [vmem:[#allocation7 + $0x90] sm:$0xff]
    %v182 = vld [vmem:[#allocation7 + $0x98] sm:$0xff]
    %v183 = vld [vmem:[#allocation7 + $0xa0] sm:$0xff]
    %v184 = vld [vmem:[#allocation7 + $0xa8] sm:$0xff]
    %v185 = vld [vmem:[#allocation7 + $0xb0] sm:$0xff]
    %v186 = vld [vmem:[#allocation7 + $0xb8] sm:$0xff]
    %v187 = vld [vmem:[#allocation7 + $0xc0] sm:$0xff]
    %v188 = vld [vmem:[#allocation7 + $0xc8] sm:$0xff]
    %v189 = vld [vmem:[#allocation7 + $0xd0] sm:$0xff]
    %v190 = vld [vmem:[#allocation7 + $0xd8] sm:$0xff]
    %v191 = vld [vmem:[#allocation7 + $0xe0] sm:$0xff]
    %v192 = vld [vmem:[#allocation7 + $0xe8] sm:$0xff]
    %v193 = vld [vmem:[#allocation7 + $0xf0] sm:$0xff]
    %v194 = vld [vmem:[#allocation7 + $0xf8] sm:$0xff]
    %v195 = vld [vmem:[#allocation7 + $0x100] sm:$0xff]
    %v196 = vld [vmem:[#allocation7 + $0x108] sm:$0xff]
    %v197 = vld [vmem:[#allocation7 + $0x110] sm:$0xff]
    %v198 = vld [vmem:[#allocation7 + $0x118] sm:$0xff]
    %v199 = vld [vmem:[#allocation7 + $0x120] sm:$0xff]
    %v200 = vld [vmem:[#allocation7 + $0x128] sm:$0xff]
    %v201 = vld [vmem:[#allocation7 + $0x130] sm:$0xff]
    %v202 = vld [vmem:[#allocation7 + $0x138] sm:$0xff]
    %v203 = vld [vmem:[#allocation7 + $0x140] sm:$0xff]
    %v204 = vld [vmem:[#allocation7 + $0x148] sm:$0xff]
    %v205 = vld [vmem:[#allocation7 + $0x150] sm:$0xff]
    %v206 = vld [vmem:[#allocation7 + $0x158] sm:$0xff]
    %v207 = vld [vmem:[#allocation7 + $0x160] sm:$0xff]
    %v208 = vld [vmem:[#allocation7 + $0x168] sm:$0xff]
    %v209 = vld [vmem:[#allocation7 + $0x170] sm:$0xff]
    %v210 = vld [vmem:[#allocation7 + $0x178] sm:$0xff]
    %v211 = vld [vmem:[#allocation7 + $0x180] sm:$0xff]
    %v212 = vld [vmem:[#allocation7 + $0x188] sm:$0xff]
    %v213 = vld [vmem:[#allocation7 + $0x190] sm:$0xff]
    %v214 = vld [vmem:[#allocation7 + $0x198] sm:$0xff]
    %v215 = vld [vmem:[#allocation7 + $0x1a0] sm:$0xff]
    %v216 = vld [vmem:[#allocation7 + $0x1a8] sm:$0xff]
    %v217 = vld [vmem:[#allocation7 + $0x1b0] sm:$0xff]
    %v218 = vld [vmem:[#allocation7 + $0x1b8] sm:$0xff]
    %v219 = vld [vmem:[#allocation7 + $0x1c0] sm:$0xff]
    %v220 = vld [vmem:[#allocation7 + $0x1c8] sm:$0xff]
    %v221 = vld [vmem:[#allocation7 + $0x1d0] sm:$0xff]
    %v222 = vld [vmem:[#allocation7 + $0x1d8] sm:$0xff]
    %v223 = vld [vmem:[#allocation7 + $0x1e0] sm:$0xff]
    %v224 = vld [vmem:[#allocation7 + $0x1e8] sm:$0xff]
    %v225 = vld [vmem:[#allocation7 + $0x1f0] sm:$0xff]
    %v226 = vld [vmem:[#allocation7 + $0x1f8] sm:$0xff]
    %v227 = vld [vmem:[#allocation7 + $0x200] sm:$0xff]
    %v228 = vld [vmem:[#allocation7 + $0x208] sm:$0xff]
    %v229 = vld [vmem:[#allocation7 + $0x210] sm:$0xff]
    %v230 = vld [vmem:[#allocation7 + $0x218] sm:$0xff]
    %v231 = vld [vmem:[#allocation7 + $0x220] sm:$0xff]
    %v232 = vld [vmem:[#allocation7 + $0x228] sm:$0xff]
    %v233 = vld [vmem:[#allocation7 + $0x230] sm:$0xff]
    %v234 = vld [vmem:[#allocation7 + $0x238] sm:$0xff]
    %v235 = vld [vmem:[#allocation7 + $0x240] sm:$0xff]
    %v236 = vld [vmem:[#allocation7 + $0x248] sm:$0xff]
    %v237 = vld [vmem:[#allocation7 + $0x250] sm:$0xff]
    %v238 = vld [vmem:[#allocation7 + $0x258] sm:$0xff]
    %v239 = vld [vmem:[#allocation7 + $0x260] sm:$0xff]
    %v240 = vld [vmem:[#allocation7 + $0x268] sm:$0xff]
    %v241 = vld [vmem:[#allocation7 + $0x270] sm:$0xff]
    %v242 = vld [vmem:[#allocation7 + $0x278] sm:$0xff]
    %v243 = vld [vmem:[#allocation7 + $0x280] sm:$0xff]
    %v244 = vld [vmem:[#allocation7 + $0x288] sm:$0xff]
    %v245 = vld [vmem:[#allocation7 + $0x290] sm:$0xff]
    %v246 = vld [vmem:[#allocation7 + $0x298] sm:$0xff]
    %v247 = vld [vmem:[#allocation7 + $0x2a0] sm:$0xff]
    %v248 = vld [vmem:[#allocation7 + $0x2a8] sm:$0xff]
    %v249 = vld [vmem:[#allocation7 + $0x2b0] sm:$0xff]
    %v250 = vld [vmem:[#allocation7 + $0x2b8] sm:$0xff]
    %v251 = vld [vmem:[#allocation7 + $0x2c0] sm:$0xff]
    %v252 = vld [vmem:[#allocation7 + $0x2c8] sm:$0xff]
    %v253 = vld [vmem:[#allocation7 + $0x2d0] sm:$0xff]
    %v254 = vld [vmem:[#allocation7 + $0x2d8] sm:$0xff]
    %v255 = vld [vmem:[#allocation7 + $0x2e0] sm:$0xff]
    %v256 = vld [vmem:[#allocation7 + $0x2e8] sm:$0xff]
    %v257 = vld [vmem:[#allocation7 + $0x2f0] sm:$0xff]
    %v258 = vld [vmem:[#allocation7 + $0x2f8] sm:$0xff]
    %v259 = vld [vmem:[#allocation7 + $0x300] sm:$0xff]
    %v260 = vld [vmem:[#allocation7 + $0x308] sm:$0xff]
    %v261 = vld [vmem:[#allocation7 + $0x310] sm:$0xff]
    %v262 = vld [vmem:[#allocation7 + $0x318] sm:$0xff]
    %v263 = vld [vmem:[#allocation7 + $0x320] sm:$0xff]
    %v264 = vld [vmem:[#allocation7 + $0x328] sm:$0xff]
    %v265 = vld [vmem:[#allocation7 + $0x330] sm:$0xff]
    %v266 = vld [vmem:[#allocation7 + $0x338] sm:$0xff]
    %v267 = vld [vmem:[#allocation7 + $0x340] sm:$0xff]
    %v268 = vld [vmem:[#allocation7 + $0x348] sm:$0xff]
    %v269 = vld [vmem:[#allocation7 + $0x350] sm:$0xff]
    %v270 = vld [vmem:[#allocation7 + $0x358] sm:$0xff]
    %v271 = vld [vmem:[#allocation7 + $0x360] sm:$0xff]
    %v272 = vld [vmem:[#allocation7 + $0x368] sm:$0xff]
    %v273 = vld [vmem:[#allocation7 + $0x370] sm:$0xff]
    %v274 = vld [vmem:[#allocation7 + $0x378] sm:$0xff]
    %v275 = vld [vmem:[#allocation7 + $0x380] sm:$0xff]
    %v276 = vld [vmem:[#allocation7 + $0x388] sm:$0xff]
    %v277 = vld [vmem:[#allocation7 + $0x390] sm:$0xff]
    %v278 = vld [vmem:[#allocation7 + $0x398] sm:$0xff]
    %v279 = vld [vmem:[#allocation7 + $0x3a0] sm:$0xff]
    %v280 = vld [vmem:[#allocation7 + $0x3a8] sm:$0xff]
    %v281 = vld [vmem:[#allocation7 + $0x3b0] sm:$0xff]
    %v282 = vld [vmem:[#allocation7 + $0x3b8] sm:$0xff]
    %v283 = vld [vmem:[#allocation7 + $0x3c0] sm:$0xff]
    %v284 = vld [vmem:[#allocation7 + $0x3c8] sm:$0xff]
    %v285 = vld [vmem:[#allocation7 + $0x3d0] sm:$0xff]
    %v286 = vld [vmem:[#allocation7 + $0x3d8] sm:$0xff]
    %v287 = vld [vmem:[#allocation7 + $0x3e0] sm:$0xff]
    %v288 = vld [vmem:[#allocation7 + $0x3e8] sm:$0xff]
    %v289 = vld [vmem:[#allocation7 + $0x3f0] sm:$0xff]
    %v290 = vld [vmem:[#allocation7 + $0x3f8] sm:$0xff]
    %v291 = vld [vmem:[#allocation7 + $0x400] sm:$0xff]
    %v292 = vld [vmem:[#allocation7 + $0x408] sm:$0xff]
    %v293 = vld [vmem:[#allocation7 + $0x410] sm:$0xff]
    %v294 = vld [vmem:[#allocation7 + $0x418] sm:$0xff]
    %v295 = vld [vmem:[#allocation7 + $0x420] sm:$0xff]
    %v296 = vld [vmem:[#allocation7 + $0x428] sm:$0xff]
    %v297 = vld [vmem:[#allocation7 + $0x430] sm:$0xff]
    %v298 = vld [vmem:[#allocation7 + $0x438] sm:$0xff]
    %v299 = vld [vmem:[#allocation7 + $0x440] sm:$0xff]
    %v300 = vld [vmem:[#allocation7 + $0x448] sm:$0xff]
    %v301 = vld [vmem:[#allocation7 + $0x450] sm:$0xff]
    %v302 = vld [vmem:[#allocation7 + $0x458] sm:$0xff]
    %v303 = vld [vmem:[#allocation7 + $0x460] sm:$0xff]
    %v304 = vld [vmem:[#allocation7 + $0x468] sm:$0xff]
    %v305 = vld [vmem:[#allocation7 + $0x470] sm:$0xff]
    %v306 = vld [vmem:[#allocation7 + $0x478] sm:$0xff]
    %v307 = vld [vmem:[#allocation7 + $0x480] sm:$0xff]
    %v308 = vld [vmem:[#allocation7 + $0x488] sm:$0xff]
    %v309 = vld [vmem:[#allocation7 + $0x490] sm:$0xff]
    %v310 = vld [vmem:[#allocation7 + $0x498] sm:$0xff]
    %v311 = vld [vmem:[#allocation7 + $0x4a0] sm:$0xff]
    %v312 = vld [vmem:[#allocation7 + $0x4a8] sm:$0xff]
    %v313 = vld [vmem:[#allocation7 + $0x4b0] sm:$0xff]
    %v314 = vld [vmem:[#allocation7 + $0x4b8] sm:$0xff]
    %v315 = vld [vmem:[#allocation7 + $0x4c0] sm:$0xff]
    %v316 = vld [vmem:[#allocation7 + $0x4c8] sm:$0xff]
    %v317 = vld [vmem:[#allocation7 + $0x4d0] sm:$0xff]
    %v318 = vld [vmem:[#allocation7 + $0x4d8] sm:$0xff]
    %v319 = vld [vmem:[#allocation7 + $0x4e0] sm:$0xff]
    %v320 = vld [vmem:[#allocation7 + $0x4e8] sm:$0xff]
    %v321 = vld [vmem:[#allocation7 + $0x4f0] sm:$0xff]
    %v322 = vld [vmem:[#allocation7 + $0x4f8] sm:$0xff]
    %v323 = vld [vmem:[%s3] sm:$0x3]
    %v325 = vlaneseq
    %v326 = vshrl.u32 %v325, 7
    %v327 = vsub.s32 0, %v326
    %v328 = vrot.slane %v323, %v327
    %v329 = vlaneseq
    %v330 = vshrl.u32 %v329, 7
    %v331 = vsub.s32 1, %v330
    %v332 = vrot.slane %v323, %v331
    %v495 = vunpack.c.l.b16 %v163
    %v496 = vunpack.c.h.b16 %v163
    %v497 = vunpack.c.l.b16 %v164
    %v498 = vunpack.c.h.b16 %v164
    %v499 = vunpack.c.l.b16 %v165
    %v500 = vunpack.c.h.b16 %v165
    %v501 = vunpack.c.l.b16 %v166
    %v502 = vunpack.c.h.b16 %v166
    %v503 = vunpack.c.l.b16 %v167
    %v504 = vunpack.c.h.b16 %v167
    %v505 = vunpack.c.l.b16 %v168
    %v506 = vunpack.c.h.b16 %v168
    %v507 = vunpack.c.l.b16 %v169
    %v508 = vunpack.c.h.b16 %v169
    %v509 = vunpack.c.l.b16 %v170
    %v510 = vunpack.c.h.b16 %v170
    %v511 = vunpack.c.l.b16 %v171
    %v512 = vunpack.c.h.b16 %v171
    %v513 = vunpack.c.l.b16 %v172
    %v514 = vunpack.c.h.b16 %v172
    %v515 = vunpack.c.l.b16 %v173
    %v516 = vunpack.c.h.b16 %v173
    %v517 = vunpack.c.l.b16 %v174
    %v518 = vunpack.c.h.b16 %v174
    %v519 = vunpack.c.l.b16 %v175
    %v520 = vunpack.c.h.b16 %v175
    %v521 = vunpack.c.l.b16 %v176
    %v522 = vunpack.c.h.b16 %v176
    %v523 = vunpack.c.l.b16 %v177
    %v524 = vunpack.c.h.b16 %v177
    %v525 = vunpack.c.l.b16 %v178
    %v526 = vunpack.c.h.b16 %v178
    %v527 = vunpack.c.l.b16 %v179
    %v528 = vunpack.c.h.b16 %v179
    %v529 = vunpack.c.l.b16 %v180
    %v530 = vunpack.c.h.b16 %v180
    %v531 = vunpack.c.l.b16 %v181
    %v532 = vunpack.c.h.b16 %v181
    %v533 = vunpack.c.l.b16 %v182
    %v534 = vunpack.c.h.b16 %v182
    %v535 = vunpack.c.l.b16 %v183
    %v536 = vunpack.c.h.b16 %v183
    %v537 = vunpack.c.l.b16 %v184
    %v538 = vunpack.c.h.b16 %v184
    %v539 = vunpack.c.l.b16 %v185
    %v540 = vunpack.c.h.b16 %v185
    %v541 = vunpack.c.l.b16 %v186
    %v542 = vunpack.c.h.b16 %v186
    %v543 = vunpack.c.l.b16 %v187
    %v544 = vunpack.c.h.b16 %v187
    %v545 = vunpack.c.l.b16 %v188
    %v546 = vunpack.c.h.b16 %v188
    %v547 = vunpack.c.l.b16 %v189
    %v548 = vunpack.c.h.b16 %v189
    %v549 = vunpack.c.l.b16 %v190
    %v550 = vunpack.c.h.b16 %v190
    %v551 = vunpack.c.l.b16 %v191
    %v552 = vunpack.c.h.b16 %v191
    %v553 = vunpack.c.l.b16 %v192
    %v554 = vunpack.c.h.b16 %v192
    %v555 = vunpack.c.l.b16 %v193
    %v556 = vunpack.c.h.b16 %v193
    %v557 = vunpack.c.l.b16 %v194
    %v558 = vunpack.c.h.b16 %v194
    %v559 = vunpack.c.l.b16 %v195
    %v560 = vunpack.c.h.b16 %v195
    %v561 = vunpack.c.l.b16 %v196
    %v562 = vunpack.c.h.b16 %v196
    %v563 = vunpack.c.l.b16 %v197
    %v564 = vunpack.c.h.b16 %v197
    %v565 = vunpack.c.l.b16 %v198
    %v566 = vunpack.c.h.b16 %v198
    %v567 = vunpack.c.l.b16 %v199
    %v568 = vunpack.c.h.b16 %v199
    %v569 = vunpack.c.l.b16 %v200
    %v570 = vunpack.c.h.b16 %v200
    %v571 = vunpack.c.l.b16 %v201
    %v572 = vunpack.c.h.b16 %v201
    %v573 = vunpack.c.l.b16 %v202
    %v574 = vunpack.c.h.b16 %v202
    %v575 = vunpack.c.l.b16 %v203
    %v576 = vunpack.c.h.b16 %v203
    %v577 = vunpack.c.l.b16 %v204
    %v578 = vunpack.c.h.b16 %v204
    %v579 = vunpack.c.l.b16 %v205
    %v580 = vunpack.c.h.b16 %v205
    %v581 = vunpack.c.l.b16 %v206
    %v582 = vunpack.c.h.b16 %v206
    %v583 = vunpack.c.l.b16 %v207
    %v584 = vunpack.c.h.b16 %v207
    %v585 = vunpack.c.l.b16 %v208
    %v586 = vunpack.c.h.b16 %v208
    %v587 = vunpack.c.l.b16 %v209
    %v588 = vunpack.c.h.b16 %v209
    %v589 = vunpack.c.l.b16 %v210
    %v590 = vunpack.c.h.b16 %v210
    %v591 = vunpack.c.l.b16 %v211
    %v592 = vunpack.c.h.b16 %v211
    %v593 = vunpack.c.l.b16 %v212
    %v594 = vunpack.c.h.b16 %v212
    %v595 = vunpack.c.l.b16 %v213
    %v596 = vunpack.c.h.b16 %v213
    %v597 = vunpack.c.l.b16 %v214
    %v598 = vunpack.c.h.b16 %v214
    %v599 = vunpack.c.l.b16 %v215
    %v600 = vunpack.c.h.b16 %v215
    %v601 = vunpack.c.l.b16 %v216
    %v602 = vunpack.c.h.b16 %v216
    %v603 = vunpack.c.l.b16 %v217
    %v604 = vunpack.c.h.b16 %v217
    %v605 = vunpack.c.l.b16 %v218
    %v606 = vunpack.c.h.b16 %v218
    %v607 = vunpack.c.l.b16 %v219
    %v608 = vunpack.c.h.b16 %v219
    %v609 = vunpack.c.l.b16 %v220
    %v610 = vunpack.c.h.b16 %v220
    %v611 = vunpack.c.l.b16 %v221
    %v612 = vunpack.c.h.b16 %v221
    %v613 = vunpack.c.l.b16 %v222
    %v614 = vunpack.c.h.b16 %v222
    %v615 = vunpack.c.l.b16 %v223
    %v616 = vunpack.c.h.b16 %v223
    %v617 = vunpack.c.l.b16 %v224
    %v618 = vunpack.c.h.b16 %v224
    %v619 = vunpack.c.l.b16 %v225
    %v620 = vunpack.c.h.b16 %v225
    %v621 = vunpack.c.l.b16 %v226
    %v622 = vunpack.c.h.b16 %v226
    %v623 = vunpack.c.l.b16 %v227
    %v624 = vunpack.c.h.b16 %v227
    %v625 = vunpack.c.l.b16 %v228
    %v626 = vunpack.c.h.b16 %v228
    %v627 = vunpack.c.l.b16 %v229
    %v628 = vunpack.c.h.b16 %v229
    %v629 = vunpack.c.l.b16 %v230
    %v630 = vunpack.c.h.b16 %v230
    %v631 = vunpack.c.l.b16 %v231
    %v632 = vunpack.c.h.b16 %v231
    %v633 = vunpack.c.l.b16 %v232
    %v634 = vunpack.c.h.b16 %v232
    %v635 = vunpack.c.l.b16 %v233
    %v636 = vunpack.c.h.b16 %v233
    %v637 = vunpack.c.l.b16 %v234
    %v638 = vunpack.c.h.b16 %v234
    %v639 = vunpack.c.l.b16 %v235
    %v640 = vunpack.c.h.b16 %v235
    %v641 = vunpack.c.l.b16 %v236
    %v642 = vunpack.c.h.b16 %v236
    %v643 = vunpack.c.l.b16 %v237
    %v644 = vunpack.c.h.b16 %v237
    %v645 = vunpack.c.l.b16 %v238
    %v646 = vunpack.c.h.b16 %v238
    %v647 = vunpack.c.l.b16 %v239
    %v648 = vunpack.c.h.b16 %v239
    %v649 = vunpack.c.l.b16 %v240
    %v650 = vunpack.c.h.b16 %v240
    %v651 = vunpack.c.l.b16 %v241
    %v652 = vunpack.c.h.b16 %v241
    %v653 = vunpack.c.l.b16 %v242
    %v654 = vunpack.c.h.b16 %v242
    %v655 = vunpack.c.l.b16 %v243
    %v656 = vunpack.c.h.b16 %v243
    %v657 = vunpack.c.l.b16 %v244
    %v658 = vunpack.c.h.b16 %v244
    %v659 = vunpack.c.l.b16 %v245
    %v660 = vunpack.c.h.b16 %v245
    %v661 = vunpack.c.l.b16 %v246
    %v662 = vunpack.c.h.b16 %v246
    %v663 = vunpack.c.l.b16 %v247
    %v664 = vunpack.c.h.b16 %v247
    %v665 = vunpack.c.l.b16 %v248
    %v666 = vunpack.c.h.b16 %v248
    %v667 = vunpack.c.l.b16 %v249
    %v668 = vunpack.c.h.b16 %v249
    %v669 = vunpack.c.l.b16 %v250
    %v670 = vunpack.c.h.b16 %v250
    %v671 = vunpack.c.l.b16 %v251
    %v672 = vunpack.c.h.b16 %v251
    %v673 = vunpack.c.l.b16 %v252
    %v674 = vunpack.c.h.b16 %v252
    %v675 = vunpack.c.l.b16 %v253
    %v676 = vunpack.c.h.b16 %v253
    %v677 = vunpack.c.l.b16 %v254
    %v678 = vunpack.c.h.b16 %v254
    %v679 = vunpack.c.l.b16 %v255
    %v680 = vunpack.c.h.b16 %v255
    %v681 = vunpack.c.l.b16 %v256
    %v682 = vunpack.c.h.b16 %v256
    %v683 = vunpack.c.l.b16 %v257
    %v684 = vunpack.c.h.b16 %v257
    %v685 = vunpack.c.l.b16 %v258
    %v686 = vunpack.c.h.b16 %v258
    %v687 = vunpack.c.l.b16 %v259
    %v688 = vunpack.c.h.b16 %v259
    %v689 = vunpack.c.l.b16 %v260
    %v690 = vunpack.c.h.b16 %v260
    %v691 = vunpack.c.l.b16 %v261
    %v692 = vunpack.c.h.b16 %v261
    %v693 = vunpack.c.l.b16 %v262
    %v694 = vunpack.c.h.b16 %v262
    %v695 = vunpack.c.l.b16 %v263
    %v696 = vunpack.c.h.b16 %v263
    %v697 = vunpack.c.l.b16 %v264
    %v698 = vunpack.c.h.b16 %v264
    %v699 = vunpack.c.l.b16 %v265
    %v700 = vunpack.c.h.b16 %v265
    %v701 = vunpack.c.l.b16 %v266
    %v702 = vunpack.c.h.b16 %v266
    %v703 = vunpack.c.l.b16 %v267
    %v704 = vunpack.c.h.b16 %v267
    %v705 = vunpack.c.l.b16 %v268
    %v706 = vunpack.c.h.b16 %v268
    %v707 = vunpack.c.l.b16 %v269
    %v708 = vunpack.c.h.b16 %v269
    %v709 = vunpack.c.l.b16 %v270
    %v710 = vunpack.c.h.b16 %v270
    %v711 = vunpack.c.l.b16 %v271
    %v712 = vunpack.c.h.b16 %v271
    %v713 = vunpack.c.l.b16 %v272
    %v714 = vunpack.c.h.b16 %v272
    %v715 = vunpack.c.l.b16 %v273
    %v716 = vunpack.c.h.b16 %v273
    %v717 = vunpack.c.l.b16 %v274
    %v718 = vunpack.c.h.b16 %v274
    %v719 = vunpack.c.l.b16 %v275
    %v720 = vunpack.c.h.b16 %v275
    %v721 = vunpack.c.l.b16 %v276
    %v722 = vunpack.c.h.b16 %v276
    %v723 = vunpack.c.l.b16 %v277
    %v724 = vunpack.c.h.b16 %v277
    %v725 = vunpack.c.l.b16 %v278
    %v726 = vunpack.c.h.b16 %v278
    %v727 = vunpack.c.l.b16 %v279
    %v728 = vunpack.c.h.b16 %v279
    %v729 = vunpack.c.l.b16 %v280
    %v730 = vunpack.c.h.b16 %v280
    %v731 = vunpack.c.l.b16 %v281
    %v732 = vunpack.c.h.b16 %v281
    %v733 = vunpack.c.l.b16 %v282
    %v734 = vunpack.c.h.b16 %v282
    %v735 = vunpack.c.l.b16 %v283
    %v736 = vunpack.c.h.b16 %v283
    %v737 = vunpack.c.l.b16 %v284
    %v738 = vunpack.c.h.b16 %v284
    %v739 = vunpack.c.l.b16 %v285
    %v740 = vunpack.c.h.b16 %v285
    %v741 = vunpack.c.l.b16 %v286
    %v742 = vunpack.c.h.b16 %v286
    %v743 = vunpack.c.l.b16 %v287
    %v744 = vunpack.c.h.b16 %v287
    %v745 = vunpack.c.l.b16 %v288
    %v746 = vunpack.c.h.b16 %v288
    %v747 = vunpack.c.l.b16 %v289
    %v748 = vunpack.c.h.b16 %v289
    %v749 = vunpack.c.l.b16 %v290
    %v750 = vunpack.c.h.b16 %v290
    %v751 = vunpack.c.l.b16 %v291
    %v752 = vunpack.c.h.b16 %v291
    %v753 = vunpack.c.l.b16 %v292
    %v754 = vunpack.c.h.b16 %v292
    %v755 = vunpack.c.l.b16 %v293
    %v756 = vunpack.c.h.b16 %v293
    %v757 = vunpack.c.l.b16 %v294
    %v758 = vunpack.c.h.b16 %v294
    %v759 = vunpack.c.l.b16 %v295
    %v760 = vunpack.c.h.b16 %v295
    %v761 = vunpack.c.l.b16 %v296
    %v762 = vunpack.c.h.b16 %v296
    %v763 = vunpack.c.l.b16 %v297
    %v764 = vunpack.c.h.b16 %v297
    %v765 = vunpack.c.l.b16 %v298
    %v766 = vunpack.c.h.b16 %v298
    %v767 = vunpack.c.l.b16 %v299
    %v768 = vunpack.c.h.b16 %v299
    %v769 = vunpack.c.l.b16 %v300
    %v770 = vunpack.c.h.b16 %v300
    %v771 = vunpack.c.l.b16 %v301
    %v772 = vunpack.c.h.b16 %v301
    %v773 = vunpack.c.l.b16 %v302
    %v774 = vunpack.c.h.b16 %v302
    %v775 = vunpack.c.l.b16 %v303
    %v776 = vunpack.c.h.b16 %v303
    %v777 = vunpack.c.l.b16 %v304
    %v778 = vunpack.c.h.b16 %v304
    %v779 = vunpack.c.l.b16 %v305
    %v780 = vunpack.c.h.b16 %v305
    %v781 = vunpack.c.l.b16 %v306
    %v782 = vunpack.c.h.b16 %v306
    %v783 = vunpack.c.l.b16 %v307
    %v784 = vunpack.c.h.b16 %v307
    %v785 = vunpack.c.l.b16 %v308
    %v786 = vunpack.c.h.b16 %v308
    %v787 = vunpack.c.l.b16 %v309
    %v788 = vunpack.c.h.b16 %v309
    %v789 = vunpack.c.l.b16 %v310
    %v790 = vunpack.c.h.b16 %v310
    %v791 = vunpack.c.l.b16 %v311
    %v792 = vunpack.c.h.b16 %v311
    %v793 = vunpack.c.l.b16 %v312
    %v794 = vunpack.c.h.b16 %v312
    %v795 = vunpack.c.l.b16 %v313
    %v796 = vunpack.c.h.b16 %v313
    %v797 = vunpack.c.l.b16 %v314
    %v798 = vunpack.c.h.b16 %v314
    %v799 = vunpack.c.l.b16 %v315
    %v800 = vunpack.c.h.b16 %v315
    %v801 = vunpack.c.l.b16 %v316
    %v802 = vunpack.c.h.b16 %v316
    %v803 = vunpack.c.l.b16 %v317
    %v804 = vunpack.c.h.b16 %v317
    %v805 = vunpack.c.l.b16 %v318
    %v806 = vunpack.c.h.b16 %v318
    %v807 = vunpack.c.l.b16 %v319
    %v808 = vunpack.c.h.b16 %v319
    %v809 = vunpack.c.l.b16 %v320
    %v810 = vunpack.c.h.b16 %v320
    %v811 = vunpack.c.l.b16 %v321
    %v812 = vunpack.c.h.b16 %v321
    %v813 = vunpack.c.l.b16 %v322
    %v814 = vunpack.c.h.b16 %v322
    %v815 = vpack.c.b16 %v497, %v495
    %v816 = vpack.c.b16 %v498, %v496
    %v817 = vpack.c.b16 %v501, %v499
    %v818 = vpack.c.b16 %v502, %v500
    %v819 = vpack.c.b16 %v505, %v503
    %v820 = vpack.c.b16 %v506, %v504
    %v821 = vpack.c.b16 %v509, %v507
    %v822 = vpack.c.b16 %v510, %v508
    %v823 = vpack.c.b16 %v513, %v511
    %v824 = vpack.c.b16 %v514, %v512
    %v825 = vpack.c.b16 %v517, %v515
    %v826 = vpack.c.b16 %v518, %v516
    %v827 = vpack.c.b16 %v521, %v519
    %v828 = vpack.c.b16 %v522, %v520
    %v829 = vpack.c.b16 %v525, %v523
    %v830 = vpack.c.b16 %v526, %v524
    %v831 = vpack.c.b16 %v529, %v527
    %v832 = vpack.c.b16 %v530, %v528
    %v833 = vpack.c.b16 %v533, %v531
    %v834 = vpack.c.b16 %v534, %v532
    %v835 = vpack.c.b16 %v537, %v535
    %v836 = vpack.c.b16 %v538, %v536
    %v837 = vpack.c.b16 %v541, %v539
    %v838 = vpack.c.b16 %v542, %v540
    %v839 = vpack.c.b16 %v545, %v543
    %v840 = vpack.c.b16 %v546, %v544
    %v841 = vpack.c.b16 %v549, %v547
    %v842 = vpack.c.b16 %v550, %v548
    %v843 = vpack.c.b16 %v553, %v551
    %v844 = vpack.c.b16 %v554, %v552
    %v845 = vpack.c.b16 %v557, %v555
    %v846 = vpack.c.b16 %v558, %v556
    %v847 = vpack.c.b16 %v561, %v559
    %v848 = vpack.c.b16 %v562, %v560
    %v849 = vpack.c.b16 %v565, %v563
    %v850 = vpack.c.b16 %v566, %v564
    %v851 = vpack.c.b16 %v569, %v567
    %v852 = vpack.c.b16 %v570, %v568
    %v853 = vpack.c.b16 %v573, %v571
    %v854 = vpack.c.b16 %v574, %v572
    %v855 = vpack.c.b16 %v577, %v575
    %v856 = vpack.c.b16 %v578, %v576
    %v857 = vpack.c.b16 %v581, %v579
    %v858 = vpack.c.b16 %v582, %v580
    %v859 = vpack.c.b16 %v585, %v583
    %v860 = vpack.c.b16 %v586, %v584
    %v861 = vpack.c.b16 %v589, %v587
    %v862 = vpack.c.b16 %v590, %v588
    %v863 = vpack.c.b16 %v593, %v591
    %v864 = vpack.c.b16 %v594, %v592
    %v865 = vpack.c.b16 %v597, %v595
    %v866 = vpack.c.b16 %v598, %v596
    %v867 = vpack.c.b16 %v601, %v599
    %v868 = vpack.c.b16 %v602, %v600
    %v869 = vpack.c.b16 %v605, %v603
    %v870 = vpack.c.b16 %v606, %v604
    %v871 = vpack.c.b16 %v609, %v607
    %v872 = vpack.c.b16 %v610, %v608
    %v873 = vpack.c.b16 %v613, %v611
    %v874 = vpack.c.b16 %v614, %v612
    %v875 = vpack.c.b16 %v617, %v615
    %v876 = vpack.c.b16 %v618, %v616
    %v877 = vpack.c.b16 %v621, %v619
    %v878 = vpack.c.b16 %v622, %v620
    %v879 = vpack.c.b16 %v625, %v623
    %v880 = vpack.c.b16 %v626, %v624
    %v881 = vpack.c.b16 %v629, %v627
    %v882 = vpack.c.b16 %v630, %v628
    %v883 = vpack.c.b16 %v633, %v631
    %v884 = vpack.c.b16 %v634, %v632
    %v885 = vpack.c.b16 %v637, %v635
    %v886 = vpack.c.b16 %v638, %v636
    %v887 = vpack.c.b16 %v641, %v639
    %v888 = vpack.c.b16 %v642, %v640
    %v889 = vpack.c.b16 %v645, %v643
    %v890 = vpack.c.b16 %v646, %v644
    %v891 = vpack.c.b16 %v649, %v647
    %v892 = vpack.c.b16 %v650, %v648
    %v893 = vpack.c.b16 %v653, %v651
    %v894 = vpack.c.b16 %v654, %v652
    %v895 = vpack.c.b16 %v657, %v655
    %v896 = vpack.c.b16 %v658, %v656
    %v897 = vpack.c.b16 %v661, %v659
    %v898 = vpack.c.b16 %v662, %v660
    %v899 = vpack.c.b16 %v665, %v663
    %v900 = vpack.c.b16 %v666, %v664
    %v901 = vpack.c.b16 %v669, %v667
    %v902 = vpack.c.b16 %v670, %v668
    %v903 = vpack.c.b16 %v673, %v671
    %v904 = vpack.c.b16 %v674, %v672
    %v905 = vpack.c.b16 %v677, %v675
    %v906 = vpack.c.b16 %v678, %v676
    %v907 = vpack.c.b16 %v681, %v679
    %v908 = vpack.c.b16 %v682, %v680
    %v909 = vpack.c.b16 %v685, %v683
    %v910 = vpack.c.b16 %v686, %v684
    %v911 = vpack.c.b16 %v689, %v687
    %v912 = vpack.c.b16 %v690, %v688
    %v913 = vpack.c.b16 %v693, %v691
    %v914 = vpack.c.b16 %v694, %v692
    %v915 = vpack.c.b16 %v697, %v695
    %v916 = vpack.c.b16 %v698, %v696
    %v917 = vpack.c.b16 %v701, %v699
    %v918 = vpack.c.b16 %v702, %v700
    %v919 = vpack.c.b16 %v705, %v703
    %v920 = vpack.c.b16 %v706, %v704
    %v921 = vpack.c.b16 %v709, %v707
    %v922 = vpack.c.b16 %v710, %v708
    %v923 = vpack.c.b16 %v713, %v711
    %v924 = vpack.c.b16 %v714, %v712
    %v925 = vpack.c.b16 %v717, %v715
    %v926 = vpack.c.b16 %v718, %v716
    %v927 = vpack.c.b16 %v721, %v719
    %v928 = vpack.c.b16 %v722, %v720
    %v929 = vpack.c.b16 %v725, %v723
    %v930 = vpack.c.b16 %v726, %v724
    %v931 = vpack.c.b16 %v729, %v727
    %v932 = vpack.c.b16 %v730, %v728
    %v933 = vpack.c.b16 %v733, %v731
    %v934 = vpack.c.b16 %v734, %v732
    %v935 = vpack.c.b16 %v737, %v735
    %v936 = vpack.c.b16 %v738, %v736
    %v937 = vpack.c.b16 %v741, %v739
    %v938 = vpack.c.b16 %v742, %v740
    %v939 = vpack.c.b16 %v745, %v743
    %v940 = vpack.c.b16 %v746, %v744
    %v941 = vpack.c.b16 %v749, %v747
    %v942 = vpack.c.b16 %v750, %v748
    %v943 = vpack.c.b16 %v753, %v751
    %v944 = vpack.c.b16 %v754, %v752
    %v945 = vpack.c.b16 %v757, %v755
    %v946 = vpack.c.b16 %v758, %v756
    %v947 = vpack.c.b16 %v761, %v759
    %v948 = vpack.c.b16 %v762, %v760
    %v949 = vpack.c.b16 %v765, %v763
    %v950 = vpack.c.b16 %v766, %v764
    %v951 = vpack.c.b16 %v769, %v767
    %v952 = vpack.c.b16 %v770, %v768
    %v953 = vpack.c.b16 %v773, %v771
    %v954 = vpack.c.b16 %v774, %v772
    %v955 = vpack.c.b16 %v777, %v775
    %v956 = vpack.c.b16 %v778, %v776
    %v957 = vpack.c.b16 %v781, %v779
    %v958 = vpack.c.b16 %v782, %v780
    %v959 = vpack.c.b16 %v785, %v783
    %v960 = vpack.c.b16 %v786, %v784
    %v961 = vpack.c.b16 %v789, %v787
    %v962 = vpack.c.b16 %v790, %v788
    %v963 = vpack.c.b16 %v793, %v791
    %v964 = vpack.c.b16 %v794, %v792
    %v965 = vpack.c.b16 %v797, %v795
    %v966 = vpack.c.b16 %v798, %v796
    %v967 = vpack.c.b16 %v801, %v799
    %v968 = vpack.c.b16 %v802, %v800
    %v969 = vpack.c.b16 %v805, %v803
    %v970 = vpack.c.b16 %v806, %v804
    %v971 = vpack.c.b16 %v809, %v807
    %v972 = vpack.c.b16 %v810, %v808
    %v973 = vpack.c.b16 %v813, %v811
    %v974 = vpack.c.b16 %v814, %v812
    %1135 = vmatprep.subr.bf16.mxu0 %v830
    %1136 = vmatpush1.bf16.msra.mxu0 %v829
    %1137 = vmatprep.subr.bf16.mxu0 %v828
    %1138 = vmatpush1.bf16.msra.mxu0 %v827
    %1139 = vmatprep.subr.bf16.mxu0 %v826
    %1140 = vmatpush1.bf16.msra.mxu0 %v825
    %1141 = vmatprep.subr.bf16.mxu0 %v824
    %1142 = vmatpush1.bf16.msra.mxu0 %v823
    %1143 = vmatprep.subr.bf16.mxu0 %v822
    %1144 = vmatpush1.bf16.msra.mxu0 %v821
    %1145 = vmatprep.subr.bf16.mxu0 %v820
    %1146 = vmatpush1.bf16.msra.mxu0 %v819
    %1147 = vmatprep.subr.bf16.mxu0 %v818
    %1148 = vmatpush1.bf16.msra.mxu0 %v817
    %1149 = vmatprep.subr.bf16.mxu0 %v816
    %1150 = vmatpush1.bf16.msra.mxu0 %v815
    %1151 = vmatprep.subr.bf16.mxu0 %v846
    %1152 = vmatpush2.bf16.msra.mxu0 %v845
    %1153 = vmatprep.subr.bf16.mxu0 %v844
    %1154 = vmatpush2.bf16.msra.mxu0 %v843
    %1155 = vmatprep.subr.bf16.mxu0 %v842
    %1156 = vmatpush2.bf16.msra.mxu0 %v841
    %1157 = vmatprep.subr.bf16.mxu0 %v840
    %1158 = vmatpush2.bf16.msra.mxu0 %v839
    %1159 = vmatprep.subr.bf16.mxu0 %v838
    %1160 = vmatpush2.bf16.msra.mxu0 %v837
    %1161 = vmatprep.subr.bf16.mxu0 %v836
    %1162 = vmatpush2.bf16.msra.mxu0 %v835
    %1163 = vmatprep.subr.bf16.mxu0 %v834
    %1164 = vmatpush2.bf16.msra.mxu0 %v833
    %1165 = vmatprep.subr.bf16.mxu0 %v832
    %1166 = vmatpush2.bf16.msra.mxu0 %v831
    %1167 = vmatprep.mubr.bf16.mxu0 %v142
    %1168 = vmatmul.mubr.bf16.gmra.mxu0 %v141
    %v1169 = vpop.f32.mrf.mxu0
    %v1170 = vadd.f32 %v328, %v1169
    %v1171 = vpop.f32.mrf.mxu0
    %v1172 = vadd.f32 %v332, %v1171
    %v1173 = vpop.f32.mrf.mxu0
    %v1174 = vpop.f32.mrf.mxu0
    %1175 = vdwg.mxu0
    %1176 = vmatprep.subr.bf16.mxu0 %v862
    %1177 = vmatpush1.bf16.msra.mxu0 %v861
    %1178 = vmatprep.subr.bf16.mxu0 %v860
    %1179 = vmatpush1.bf16.msra.mxu0 %v859
    %1180 = vmatprep.subr.bf16.mxu0 %v858
    %1181 = vmatpush1.bf16.msra.mxu0 %v857
    %1182 = vmatprep.subr.bf16.mxu0 %v856
    %1183 = vmatpush1.bf16.msra.mxu0 %v855
    %1184 = vmatprep.subr.bf16.mxu0 %v854
    %1185 = vmatpush1.bf16.msra.mxu0 %v853
    %1186 = vmatprep.subr.bf16.mxu0 %v852
    %1187 = vmatpush1.bf16.msra.mxu0 %v851
    %1188 = vmatprep.subr.bf16.mxu0 %v850
    %1189 = vmatpush1.bf16.msra.mxu0 %v849
    %1190 = vmatprep.subr.bf16.mxu0 %v848
    %1191 = vmatpush1.bf16.msra.mxu0 %v847
    %1192 = vmatprep.subr.bf16.mxu0 %v878
    %1193 = vmatpush2.bf16.msra.mxu0 %v877
    %1194 = vmatprep.subr.bf16.mxu0 %v876
    %1195 = vmatpush2.bf16.msra.mxu0 %v875
    %1196 = vmatprep.subr.bf16.mxu0 %v874
    %1197 = vmatpush2.bf16.msra.mxu0 %v873
    %1198 = vmatprep.subr.bf16.mxu0 %v872
    %1199 = vmatpush2.bf16.msra.mxu0 %v871
    %1200 = vmatprep.subr.bf16.mxu0 %v870
    %1201 = vmatpush2.bf16.msra.mxu0 %v869
    %1202 = vmatprep.subr.bf16.mxu0 %v868
    %1203 = vmatpush2.bf16.msra.mxu0 %v867
    %1204 = vmatprep.subr.bf16.mxu0 %v866
    %1205 = vmatpush2.bf16.msra.mxu0 %v865
    %1206 = vmatprep.subr.bf16.mxu0 %v864
    %1207 = vmatpush2.bf16.msra.mxu0 %v863
    %1208 = vmatprep.mubr.bf16.mxu0 %v144
    %1209 = vmatmul.mubr.bf16.gmra.mxu0 %v143
    %v1210 = vpop.f32.mrf.mxu0
    %v1211 = vadd.f32 %v1170, %v1210
    %v1212 = vpop.f32.mrf.mxu0
    %v1213 = vadd.f32 %v1172, %v1212
    %v1214 = vpop.f32.mrf.mxu0
    %v1215 = vpop.f32.mrf.mxu0
    %1216 = vdwg.mxu0
    %1217 = vmatprep.subr.bf16.mxu0 %v894
    %1218 = vmatpush1.bf16.msra.mxu0 %v893
    %1219 = vmatprep.subr.bf16.mxu0 %v892
    %1220 = vmatpush1.bf16.msra.mxu0 %v891
    %1221 = vmatprep.subr.bf16.mxu0 %v890
    %1222 = vmatpush1.bf16.msra.mxu0 %v889
    %1223 = vmatprep.subr.bf16.mxu0 %v888
    %1224 = vmatpush1.bf16.msra.mxu0 %v887
    %1225 = vmatprep.subr.bf16.mxu0 %v886
    %1226 = vmatpush1.bf16.msra.mxu0 %v885
    %1227 = vmatprep.subr.bf16.mxu0 %v884
    %1228 = vmatpush1.bf16.msra.mxu0 %v883
    %1229 = vmatprep.subr.bf16.mxu0 %v882
    %1230 = vmatpush1.bf16.msra.mxu0 %v881
    %1231 = vmatprep.subr.bf16.mxu0 %v880
    %1232 = vmatpush1.bf16.msra.mxu0 %v879
    %1233 = vmatprep.subr.bf16.mxu0 %v910
    %1234 = vmatpush2.bf16.msra.mxu0 %v909
    %1235 = vmatprep.subr.bf16.mxu0 %v908
    %1236 = vmatpush2.bf16.msra.mxu0 %v907
    %1237 = vmatprep.subr.bf16.mxu0 %v906
    %1238 = vmatpush2.bf16.msra.mxu0 %v905
    %1239 = vmatprep.subr.bf16.mxu0 %v904
    %1240 = vmatpush2.bf16.msra.mxu0 %v903
    %1241 = vmatprep.subr.bf16.mxu0 %v902
    %1242 = vmatpush2.bf16.msra.mxu0 %v901
    %1243 = vmatprep.subr.bf16.mxu0 %v900
    %1244 = vmatpush2.bf16.msra.mxu0 %v899
    %1245 = vmatprep.subr.bf16.mxu0 %v898
    %1246 = vmatpush2.bf16.msra.mxu0 %v897
    %1247 = vmatprep.subr.bf16.mxu0 %v896
    %1248 = vmatpush2.bf16.msra.mxu0 %v895
    %1249 = vmatprep.mubr.bf16.mxu0 %v146
    %1250 = vmatmul.mubr.bf16.gmra.mxu0 %v145
    %v1251 = vpop.f32.mrf.mxu0
    %v1252 = vadd.f32 %v1211, %v1251
    %v1253 = vpop.f32.mrf.mxu0
    %v1254 = vadd.f32 %v1213, %v1253
    %v1255 = vpop.f32.mrf.mxu0
    %v1256 = vpop.f32.mrf.mxu0
    %1257 = vdwg.mxu0
    %1258 = vmatprep.subr.bf16.mxu0 %v926
    %1259 = vmatpush1.bf16.msra.mxu0 %v925
    %1260 = vmatprep.subr.bf16.mxu0 %v924
    %1261 = vmatpush1.bf16.msra.mxu0 %v923
    %1262 = vmatprep.subr.bf16.mxu0 %v922
    %1263 = vmatpush1.bf16.msra.mxu0 %v921
    %1264 = vmatprep.subr.bf16.mxu0 %v920
    %1265 = vmatpush1.bf16.msra.mxu0 %v919
    %1266 = vmatprep.subr.bf16.mxu0 %v918
    %1267 = vmatpush1.bf16.msra.mxu0 %v917
    %1268 = vmatprep.subr.bf16.mxu0 %v916
    %1269 = vmatpush1.bf16.msra.mxu0 %v915
    %1270 = vmatprep.subr.bf16.mxu0 %v914
    %1271 = vmatpush1.bf16.msra.mxu0 %v913
    %1272 = vmatprep.subr.bf16.mxu0 %v912
    %1273 = vmatpush1.bf16.msra.mxu0 %v911
    %1274 = vmatprep.subr.bf16.mxu0 %v942
    %1275 = vmatpush2.bf16.msra.mxu0 %v941
    %1276 = vmatprep.subr.bf16.mxu0 %v940
    %1277 = vmatpush2.bf16.msra.mxu0 %v939
    %1278 = vmatprep.subr.bf16.mxu0 %v938
    %1279 = vmatpush2.bf16.msra.mxu0 %v937
    %1280 = vmatprep.subr.bf16.mxu0 %v936
    %1281 = vmatpush2.bf16.msra.mxu0 %v935
    %1282 = vmatprep.subr.bf16.mxu0 %v934
    %1283 = vmatpush2.bf16.msra.mxu0 %v933
    %1284 = vmatprep.subr.bf16.mxu0 %v932
    %1285 = vmatpush2.bf16.msra.mxu0 %v931
    %1286 = vmatprep.subr.bf16.mxu0 %v930
    %1287 = vmatpush2.bf16.msra.mxu0 %v929
    %1288 = vmatprep.subr.bf16.mxu0 %v928
    %1289 = vmatpush2.bf16.msra.mxu0 %v927
    %1290 = vmatprep.mubr.bf16.mxu0 %v148
    %1291 = vmatmul.mubr.bf16.gmra.mxu0 %v147
    %v1292 = vpop.f32.mrf.mxu0
    %v1293 = vadd.f32 %v1252, %v1292
    %v1294 = vpop.f32.mrf.mxu0
    %v1295 = vadd.f32 %v1254, %v1294
    %v1296 = vpop.f32.mrf.mxu0
    %v1297 = vpop.f32.mrf.mxu0
    %1298 = vdwg.mxu0
    %1299 = vmatprep.subr.bf16.mxu0 %v958
    %1300 = vmatpush1.bf16.msra.mxu0 %v957
    %1301 = vmatprep.subr.bf16.mxu0 %v956
    %1302 = vmatpush1.bf16.msra.mxu0 %v955
    %1303 = vmatprep.subr.bf16.mxu0 %v954
    %1304 = vmatpush1.bf16.msra.mxu0 %v953
    %1305 = vmatprep.subr.bf16.mxu0 %v952
    %1306 = vmatpush1.bf16.msra.mxu0 %v951
    %1307 = vmatprep.subr.bf16.mxu0 %v950
    %1308 = vmatpush1.bf16.msra.mxu0 %v949
    %1309 = vmatprep.subr.bf16.mxu0 %v948
    %1310 = vmatpush1.bf16.msra.mxu0 %v947
    %1311 = vmatprep.subr.bf16.mxu0 %v946
    %1312 = vmatpush1.bf16.msra.mxu0 %v945
    %1313 = vmatprep.subr.bf16.mxu0 %v944
    %1314 = vmatpush1.bf16.msra.mxu0 %v943
    %1315 = vmatprep.subr.bf16.mxu0 %v974
    %1316 = vmatpush2.bf16.msra.mxu0 %v973
    %1317 = vmatprep.subr.bf16.mxu0 %v972
    %1318 = vmatpush2.bf16.msra.mxu0 %v971
    %1319 = vmatprep.subr.bf16.mxu0 %v970
    %1320 = vmatpush2.bf16.msra.mxu0 %v969
    %1321 = vmatprep.subr.bf16.mxu0 %v968
    %1322 = vmatpush2.bf16.msra.mxu0 %v967
    %1323 = vmatprep.subr.bf16.mxu0 %v966
    %1324 = vmatpush2.bf16.msra.mxu0 %v965
    %1325 = vmatprep.subr.bf16.mxu0 %v964
    %1326 = vmatpush2.bf16.msra.mxu0 %v963
    %1327 = vmatprep.subr.bf16.mxu0 %v962
    %1328 = vmatpush2.bf16.msra.mxu0 %v961
    %1329 = vmatprep.subr.bf16.mxu0 %v960
    %1330 = vmatpush2.bf16.msra.mxu0 %v959
    %1331 = vmatprep.mubr.bf16.mxu0 %v150
    %1332 = vmatmul.mubr.bf16.gmra.mxu0 %v149
    %v1333 = vpop.f32.mrf.mxu0
    %v1334 = vadd.f32 %v1293, %v1333
    %v1335 = vpop.f32.mrf.mxu0
    %v1336 = vadd.f32 %v1295, %v1335
    %v1337 = vpop.f32.mrf.mxu0
    %v1338 = vpop.f32.mrf.mxu0
    %1339 = vdwg.mxu0
    %v1340 = vld [vmem:[#allocation8] sm:$0xff]
    %v1341 = vld [vmem:[#allocation8 + $0x8] sm:$0xff]
    %v1342 = vld [vmem:[#allocation8 + $0x10] sm:$0xff]
    %v1343 = vld [vmem:[#allocation8 + $0x18] sm:$0xff]
    %v1344 = vld [vmem:[#allocation8 + $0x20] sm:$0xff]
    %v1345 = vld [vmem:[#allocation8 + $0x28] sm:$0xff]
    %v1346 = vld [vmem:[#allocation8 + $0x30] sm:$0xff]
    %v1347 = vld [vmem:[#allocation8 + $0x38] sm:$0xff]
    %v1348 = vld [vmem:[#allocation8 + $0x40] sm:$0xff]
    %v1349 = vld [vmem:[#allocation8 + $0x48] sm:$0xff]
    %v1350 = vld [vmem:[#allocation8 + $0x50] sm:$0xff]
    %v1351 = vld [vmem:[#allocation8 + $0x58] sm:$0xff]
    %v1352 = vld [vmem:[#allocation8 + $0x60] sm:$0xff]
    %v1353 = vld [vmem:[#allocation8 + $0x68] sm:$0xff]
    %v1354 = vld [vmem:[#allocation8 + $0x70] sm:$0xff]
    %v1355 = vld [vmem:[#allocation8 + $0x78] sm:$0xff]
    %v1356 = vld [vmem:[#allocation8 + $0x80] sm:$0xff]
    %v1357 = vld [vmem:[#allocation8 + $0x88] sm:$0xff]
    %v1358 = vld [vmem:[#allocation8 + $0x90] sm:$0xff]
    %v1359 = vld [vmem:[#allocation8 + $0x98] sm:$0xff]
    %v1360 = vld [vmem:[#allocation8 + $0xa0] sm:$0xff]
    %v1361 = vld [vmem:[#allocation8 + $0xa8] sm:$0xff]
    %v1362 = vld [vmem:[#allocation8 + $0xb0] sm:$0xff]
    %v1363 = vld [vmem:[#allocation8 + $0xb8] sm:$0xff]
    %v1364 = vld [vmem:[#allocation8 + $0xc0] sm:$0xff]
    %v1365 = vld [vmem:[#allocation8 + $0xc8] sm:$0xff]
    %v1366 = vld [vmem:[#allocation8 + $0xd0] sm:$0xff]
    %v1367 = vld [vmem:[#allocation8 + $0xd8] sm:$0xff]
    %v1368 = vld [vmem:[#allocation8 + $0xe0] sm:$0xff]
    %v1369 = vld [vmem:[#allocation8 + $0xe8] sm:$0xff]
    %v1370 = vld [vmem:[#allocation8 + $0xf0] sm:$0xff]
    %v1371 = vld [vmem:[#allocation8 + $0xf8] sm:$0xff]
    %v1372 = vld [vmem:[#allocation8 + $0x100] sm:$0xff]
    %v1373 = vld [vmem:[#allocation8 + $0x108] sm:$0xff]
    %v1374 = vld [vmem:[#allocation8 + $0x110] sm:$0xff]
    %v1375 = vld [vmem:[#allocation8 + $0x118] sm:$0xff]
    %v1376 = vld [vmem:[#allocation8 + $0x120] sm:$0xff]
    %v1377 = vld [vmem:[#allocation8 + $0x128] sm:$0xff]
    %v1378 = vld [vmem:[#allocation8 + $0x130] sm:$0xff]
    %v1379 = vld [vmem:[#allocation8 + $0x138] sm:$0xff]
    %v1380 = vld [vmem:[#allocation8 + $0x140] sm:$0xff]
    %v1381 = vld [vmem:[#allocation8 + $0x148] sm:$0xff]
    %v1382 = vld [vmem:[#allocation8 + $0x150] sm:$0xff]
    %v1383 = vld [vmem:[#allocation8 + $0x158] sm:$0xff]
    %v1384 = vld [vmem:[#allocation8 + $0x160] sm:$0xff]
    %v1385 = vld [vmem:[#allocation8 + $0x168] sm:$0xff]
    %v1386 = vld [vmem:[#allocation8 + $0x170] sm:$0xff]
    %v1387 = vld [vmem:[#allocation8 + $0x178] sm:$0xff]
    %v1388 = vld [vmem:[#allocation8 + $0x180] sm:$0xff]
    %v1389 = vld [vmem:[#allocation8 + $0x188] sm:$0xff]
    %v1390 = vld [vmem:[#allocation8 + $0x190] sm:$0xff]
    %v1391 = vld [vmem:[#allocation8 + $0x198] sm:$0xff]
    %v1392 = vld [vmem:[#allocation8 + $0x1a0] sm:$0xff]
    %v1393 = vld [vmem:[#allocation8 + $0x1a8] sm:$0xff]
    %v1394 = vld [vmem:[#allocation8 + $0x1b0] sm:$0xff]
    %v1395 = vld [vmem:[#allocation8 + $0x1b8] sm:$0xff]
    %v1396 = vld [vmem:[#allocation8 + $0x1c0] sm:$0xff]
    %v1397 = vld [vmem:[#allocation8 + $0x1c8] sm:$0xff]
    %v1398 = vld [vmem:[#allocation8 + $0x1d0] sm:$0xff]
    %v1399 = vld [vmem:[#allocation8 + $0x1d8] sm:$0xff]
    %v1400 = vld [vmem:[#allocation8 + $0x1e0] sm:$0xff]
    %v1401 = vld [vmem:[#allocation8 + $0x1e8] sm:$0xff]
    %v1402 = vld [vmem:[#allocation8 + $0x1f0] sm:$0xff]
    %v1403 = vld [vmem:[#allocation8 + $0x1f8] sm:$0xff]
    %v1404 = vld [vmem:[#allocation8 + $0x200] sm:$0xff]
    %v1405 = vld [vmem:[#allocation8 + $0x208] sm:$0xff]
    %v1406 = vld [vmem:[#allocation8 + $0x210] sm:$0xff]
    %v1407 = vld [vmem:[#allocation8 + $0x218] sm:$0xff]
    %v1408 = vld [vmem:[#allocation8 + $0x220] sm:$0xff]
    %v1409 = vld [vmem:[#allocation8 + $0x228] sm:$0xff]
    %v1410 = vld [vmem:[#allocation8 + $0x230] sm:$0xff]
    %v1411 = vld [vmem:[#allocation8 + $0x238] sm:$0xff]
    %v1412 = vld [vmem:[#allocation8 + $0x240] sm:$0xff]
    %v1413 = vld [vmem:[#allocation8 + $0x248] sm:$0xff]
    %v1414 = vld [vmem:[#allocation8 + $0x250] sm:$0xff]
    %v1415 = vld [vmem:[#allocation8 + $0x258] sm:$0xff]
    %v1416 = vld [vmem:[#allocation8 + $0x260] sm:$0xff]
    %v1417 = vld [vmem:[#allocation8 + $0x268] sm:$0xff]
    %v1418 = vld [vmem:[#allocation8 + $0x270] sm:$0xff]
    %v1419 = vld [vmem:[#allocation8 + $0x278] sm:$0xff]
    %v1420 = vld [vmem:[#allocation8 + $0x280] sm:$0xff]
    %v1421 = vld [vmem:[#allocation8 + $0x288] sm:$0xff]
    %v1422 = vld [vmem:[#allocation8 + $0x290] sm:$0xff]
    %v1423 = vld [vmem:[#allocation8 + $0x298] sm:$0xff]
    %v1424 = vld [vmem:[#allocation8 + $0x2a0] sm:$0xff]
    %v1425 = vld [vmem:[#allocation8 + $0x2a8] sm:$0xff]
    %v1426 = vld [vmem:[#allocation8 + $0x2b0] sm:$0xff]
    %v1427 = vld [vmem:[#allocation8 + $0x2b8] sm:$0xff]
    %v1428 = vld [vmem:[#allocation8 + $0x2c0] sm:$0xff]
    %v1429 = vld [vmem:[#allocation8 + $0x2c8] sm:$0xff]
    %v1430 = vld [vmem:[#allocation8 + $0x2d0] sm:$0xff]
    %v1431 = vld [vmem:[#allocation8 + $0x2d8] sm:$0xff]
    %v1432 = vld [vmem:[#allocation8 + $0x2e0] sm:$0xff]
    %v1433 = vld [vmem:[#allocation8 + $0x2e8] sm:$0xff]
    %v1434 = vld [vmem:[#allocation8 + $0x2f0] sm:$0xff]
    %v1435 = vld [vmem:[#allocation8 + $0x2f8] sm:$0xff]
    %v1436 = vld [vmem:[%s5] sm:$0x3]
    %v1438 = vlaneseq
    %v1439 = vshrl.u32 %v1438, 7
    %v1440 = vsub.s32 0, %v1439
    %v1441 = vrot.slane %v1436, %v1440
    %v1442 = vlaneseq
    %v1443 = vshrl.u32 %v1442, 7
    %v1444 = vsub.s32 1, %v1443
    %v1445 = vrot.slane %v1436, %v1444
    %v1544 = vunpack.c.l.b16 %v1340
    %v1545 = vunpack.c.h.b16 %v1340
    %v1546 = vunpack.c.l.b16 %v1341
    %v1547 = vunpack.c.h.b16 %v1341
    %v1548 = vunpack.c.l.b16 %v1342
    %v1549 = vunpack.c.h.b16 %v1342
    %v1550 = vunpack.c.l.b16 %v1343
    %v1551 = vunpack.c.h.b16 %v1343
    %v1552 = vunpack.c.l.b16 %v1344
    %v1553 = vunpack.c.h.b16 %v1344
    %v1554 = vunpack.c.l.b16 %v1345
    %v1555 = vunpack.c.h.b16 %v1345
    %v1556 = vunpack.c.l.b16 %v1346
    %v1557 = vunpack.c.h.b16 %v1346
    %v1558 = vunpack.c.l.b16 %v1347
    %v1559 = vunpack.c.h.b16 %v1347
    %v1560 = vunpack.c.l.b16 %v1348
    %v1561 = vunpack.c.h.b16 %v1348
    %v1562 = vunpack.c.l.b16 %v1349
    %v1563 = vunpack.c.h.b16 %v1349
    %v1564 = vunpack.c.l.b16 %v1350
    %v1565 = vunpack.c.h.b16 %v1350
    %v1566 = vunpack.c.l.b16 %v1351
    %v1567 = vunpack.c.h.b16 %v1351
    %v1568 = vunpack.c.l.b16 %v1352
    %v1569 = vunpack.c.h.b16 %v1352
    %v1570 = vunpack.c.l.b16 %v1353
    %v1571 = vunpack.c.h.b16 %v1353
    %v1572 = vunpack.c.l.b16 %v1354
    %v1573 = vunpack.c.h.b16 %v1354
    %v1574 = vunpack.c.l.b16 %v1355
    %v1575 = vunpack.c.h.b16 %v1355
    %v1576 = vunpack.c.l.b16 %v1356
    %v1577 = vunpack.c.h.b16 %v1356
    %v1578 = vunpack.c.l.b16 %v1357
    %v1579 = vunpack.c.h.b16 %v1357
    %v1580 = vunpack.c.l.b16 %v1358
    %v1581 = vunpack.c.h.b16 %v1358
    %v1582 = vunpack.c.l.b16 %v1359
    %v1583 = vunpack.c.h.b16 %v1359
    %v1584 = vunpack.c.l.b16 %v1360
    %v1585 = vunpack.c.h.b16 %v1360
    %v1586 = vunpack.c.l.b16 %v1361
    %v1587 = vunpack.c.h.b16 %v1361
    %v1588 = vunpack.c.l.b16 %v1362
    %v1589 = vunpack.c.h.b16 %v1362
    %v1590 = vunpack.c.l.b16 %v1363
    %v1591 = vunpack.c.h.b16 %v1363
    %v1592 = vunpack.c.l.b16 %v1364
    %v1593 = vunpack.c.h.b16 %v1364
    %v1594 = vunpack.c.l.b16 %v1365
    %v1595 = vunpack.c.h.b16 %v1365
    %v1596 = vunpack.c.l.b16 %v1366
    %v1597 = vunpack.c.h.b16 %v1366
    %v1598 = vunpack.c.l.b16 %v1367
    %v1599 = vunpack.c.h.b16 %v1367
    %v1600 = vunpack.c.l.b16 %v1368
    %v1601 = vunpack.c.h.b16 %v1368
    %v1602 = vunpack.c.l.b16 %v1369
    %v1603 = vunpack.c.h.b16 %v1369
    %v1604 = vunpack.c.l.b16 %v1370
    %v1605 = vunpack.c.h.b16 %v1370
    %v1606 = vunpack.c.l.b16 %v1371
    %v1607 = vunpack.c.h.b16 %v1371
    %v1608 = vunpack.c.l.b16 %v1372
    %v1609 = vunpack.c.h.b16 %v1372
    %v1610 = vunpack.c.l.b16 %v1373
    %v1611 = vunpack.c.h.b16 %v1373
    %v1612 = vunpack.c.l.b16 %v1374
    %v1613 = vunpack.c.h.b16 %v1374
    %v1614 = vunpack.c.l.b16 %v1375
    %v1615 = vunpack.c.h.b16 %v1375
    %v1616 = vunpack.c.l.b16 %v1376
    %v1617 = vunpack.c.h.b16 %v1376
    %v1618 = vunpack.c.l.b16 %v1377
    %v1619 = vunpack.c.h.b16 %v1377
    %v1620 = vunpack.c.l.b16 %v1378
    %v1621 = vunpack.c.h.b16 %v1378
    %v1622 = vunpack.c.l.b16 %v1379
    %v1623 = vunpack.c.h.b16 %v1379
    %v1624 = vunpack.c.l.b16 %v1380
    %v1625 = vunpack.c.h.b16 %v1380
    %v1626 = vunpack.c.l.b16 %v1381
    %v1627 = vunpack.c.h.b16 %v1381
    %v1628 = vunpack.c.l.b16 %v1382
    %v1629 = vunpack.c.h.b16 %v1382
    %v1630 = vunpack.c.l.b16 %v1383
    %v1631 = vunpack.c.h.b16 %v1383
    %v1632 = vunpack.c.l.b16 %v1384
    %v1633 = vunpack.c.h.b16 %v1384
    %v1634 = vunpack.c.l.b16 %v1385
    %v1635 = vunpack.c.h.b16 %v1385
    %v1636 = vunpack.c.l.b16 %v1386
    %v1637 = vunpack.c.h.b16 %v1386
    %v1638 = vunpack.c.l.b16 %v1387
    %v1639 = vunpack.c.h.b16 %v1387
    %v1640 = vunpack.c.l.b16 %v1388
    %v1641 = vunpack.c.h.b16 %v1388
    %v1642 = vunpack.c.l.b16 %v1389
    %v1643 = vunpack.c.h.b16 %v1389
    %v1644 = vunpack.c.l.b16 %v1390
    %v1645 = vunpack.c.h.b16 %v1390
    %v1646 = vunpack.c.l.b16 %v1391
    %v1647 = vunpack.c.h.b16 %v1391
    %v1648 = vunpack.c.l.b16 %v1392
    %v1649 = vunpack.c.h.b16 %v1392
    %v1650 = vunpack.c.l.b16 %v1393
    %v1651 = vunpack.c.h.b16 %v1393
    %v1652 = vunpack.c.l.b16 %v1394
    %v1653 = vunpack.c.h.b16 %v1394
    %v1654 = vunpack.c.l.b16 %v1395
    %v1655 = vunpack.c.h.b16 %v1395
    %v1656 = vunpack.c.l.b16 %v1396
    %v1657 = vunpack.c.h.b16 %v1396
    %v1658 = vunpack.c.l.b16 %v1397
    %v1659 = vunpack.c.h.b16 %v1397
    %v1660 = vunpack.c.l.b16 %v1398
    %v1661 = vunpack.c.h.b16 %v1398
    %v1662 = vunpack.c.l.b16 %v1399
    %v1663 = vunpack.c.h.b16 %v1399
    %v1664 = vunpack.c.l.b16 %v1400
    %v1665 = vunpack.c.h.b16 %v1400
    %v1666 = vunpack.c.l.b16 %v1401
    %v1667 = vunpack.c.h.b16 %v1401
    %v1668 = vunpack.c.l.b16 %v1402
    %v1669 = vunpack.c.h.b16 %v1402
    %v1670 = vunpack.c.l.b16 %v1403
    %v1671 = vunpack.c.h.b16 %v1403
    %v1672 = vunpack.c.l.b16 %v1404
    %v1673 = vunpack.c.h.b16 %v1404
    %v1674 = vunpack.c.l.b16 %v1405
    %v1675 = vunpack.c.h.b16 %v1405
    %v1676 = vunpack.c.l.b16 %v1406
    %v1677 = vunpack.c.h.b16 %v1406
    %v1678 = vunpack.c.l.b16 %v1407
    %v1679 = vunpack.c.h.b16 %v1407
    %v1680 = vunpack.c.l.b16 %v1408
    %v1681 = vunpack.c.h.b16 %v1408
    %v1682 = vunpack.c.l.b16 %v1409
    %v1683 = vunpack.c.h.b16 %v1409
    %v1684 = vunpack.c.l.b16 %v1410
    %v1685 = vunpack.c.h.b16 %v1410
    %v1686 = vunpack.c.l.b16 %v1411
    %v1687 = vunpack.c.h.b16 %v1411
    %v1688 = vunpack.c.l.b16 %v1412
    %v1689 = vunpack.c.h.b16 %v1412
    %v1690 = vunpack.c.l.b16 %v1413
    %v1691 = vunpack.c.h.b16 %v1413
    %v1692 = vunpack.c.l.b16 %v1414
    %v1693 = vunpack.c.h.b16 %v1414
    %v1694 = vunpack.c.l.b16 %v1415
    %v1695 = vunpack.c.h.b16 %v1415
    %v1696 = vunpack.c.l.b16 %v1416
    %v1697 = vunpack.c.h.b16 %v1416
    %v1698 = vunpack.c.l.b16 %v1417
    %v1699 = vunpack.c.h.b16 %v1417
    %v1700 = vunpack.c.l.b16 %v1418
    %v1701 = vunpack.c.h.b16 %v1418
    %v1702 = vunpack.c.l.b16 %v1419
    %v1703 = vunpack.c.h.b16 %v1419
    %v1704 = vunpack.c.l.b16 %v1420
    %v1705 = vunpack.c.h.b16 %v1420
    %v1706 = vunpack.c.l.b16 %v1421
    %v1707 = vunpack.c.h.b16 %v1421
    %v1708 = vunpack.c.l.b16 %v1422
    %v1709 = vunpack.c.h.b16 %v1422
    %v1710 = vunpack.c.l.b16 %v1423
    %v1711 = vunpack.c.h.b16 %v1423
    %v1712 = vunpack.c.l.b16 %v1424
    %v1713 = vunpack.c.h.b16 %v1424
    %v1714 = vunpack.c.l.b16 %v1425
    %v1715 = vunpack.c.h.b16 %v1425
    %v1716 = vunpack.c.l.b16 %v1426
    %v1717 = vunpack.c.h.b16 %v1426
    %v1718 = vunpack.c.l.b16 %v1427
    %v1719 = vunpack.c.h.b16 %v1427
    %v1720 = vunpack.c.l.b16 %v1428
    %v1721 = vunpack.c.h.b16 %v1428
    %v1722 = vunpack.c.l.b16 %v1429
    %v1723 = vunpack.c.h.b16 %v1429
    %v1724 = vunpack.c.l.b16 %v1430
    %v1725 = vunpack.c.h.b16 %v1430
    %v1726 = vunpack.c.l.b16 %v1431
    %v1727 = vunpack.c.h.b16 %v1431
    %v1728 = vunpack.c.l.b16 %v1432
    %v1729 = vunpack.c.h.b16 %v1432
    %v1730 = vunpack.c.l.b16 %v1433
    %v1731 = vunpack.c.h.b16 %v1433
    %v1732 = vunpack.c.l.b16 %v1434
    %v1733 = vunpack.c.h.b16 %v1434
    %v1734 = vunpack.c.l.b16 %v1435
    %v1735 = vunpack.c.h.b16 %v1435
    %v1736 = vpack.c.b16 %v1546, %v1544
    %v1737 = vpack.c.b16 %v1547, %v1545
    %v1738 = vpack.c.b16 %v1550, %v1548
    %v1739 = vpack.c.b16 %v1551, %v1549
    %v1740 = vpack.c.b16 %v1554, %v1552
    %v1741 = vpack.c.b16 %v1555, %v1553
    %v1742 = vpack.c.b16 %v1558, %v1556
    %v1743 = vpack.c.b16 %v1559, %v1557
    %v1744 = vpack.c.b16 %v1562, %v1560
    %v1745 = vpack.c.b16 %v1563, %v1561
    %v1746 = vpack.c.b16 %v1566, %v1564
    %v1747 = vpack.c.b16 %v1567, %v1565
    %v1748 = vpack.c.b16 %v1570, %v1568
    %v1749 = vpack.c.b16 %v1571, %v1569
    %v1750 = vpack.c.b16 %v1574, %v1572
    %v1751 = vpack.c.b16 %v1575, %v1573
    %v1752 = vpack.c.b16 %v1578, %v1576
    %v1753 = vpack.c.b16 %v1579, %v1577
    %v1754 = vpack.c.b16 %v1582, %v1580
    %v1755 = vpack.c.b16 %v1583, %v1581
    %v1756 = vpack.c.b16 %v1586, %v1584
    %v1757 = vpack.c.b16 %v1587, %v1585
    %v1758 = vpack.c.b16 %v1590, %v1588
    %v1759 = vpack.c.b16 %v1591, %v1589
    %v1760 = vpack.c.b16 %v1594, %v1592
    %v1761 = vpack.c.b16 %v1595, %v1593
    %v1762 = vpack.c.b16 %v1598, %v1596
    %v1763 = vpack.c.b16 %v1599, %v1597
    %v1764 = vpack.c.b16 %v1602, %v1600
    %v1765 = vpack.c.b16 %v1603, %v1601
    %v1766 = vpack.c.b16 %v1606, %v1604
    %v1767 = vpack.c.b16 %v1607, %v1605
    %v1768 = vpack.c.b16 %v1610, %v1608
    %v1769 = vpack.c.b16 %v1611, %v1609
    %v1770 = vpack.c.b16 %v1614, %v1612
    %v1771 = vpack.c.b16 %v1615, %v1613
    %v1772 = vpack.c.b16 %v1618, %v1616
    %v1773 = vpack.c.b16 %v1619, %v1617
    %v1774 = vpack.c.b16 %v1622, %v1620
    %v1775 = vpack.c.b16 %v1623, %v1621
    %v1776 = vpack.c.b16 %v1626, %v1624
    %v1777 = vpack.c.b16 %v1627, %v1625
    %v1778 = vpack.c.b16 %v1630, %v1628
    %v1779 = vpack.c.b16 %v1631, %v1629
    %v1780 = vpack.c.b16 %v1634, %v1632
    %v1781 = vpack.c.b16 %v1635, %v1633
    %v1782 = vpack.c.b16 %v1638, %v1636
    %v1783 = vpack.c.b16 %v1639, %v1637
    %v1784 = vpack.c.b16 %v1642, %v1640
    %v1785 = vpack.c.b16 %v1643, %v1641
    %v1786 = vpack.c.b16 %v1646, %v1644
    %v1787 = vpack.c.b16 %v1647, %v1645
    %v1788 = vpack.c.b16 %v1650, %v1648
    %v1789 = vpack.c.b16 %v1651, %v1649
    %v1790 = vpack.c.b16 %v1654, %v1652
    %v1791 = vpack.c.b16 %v1655, %v1653
    %v1792 = vpack.c.b16 %v1658, %v1656
    %v1793 = vpack.c.b16 %v1659, %v1657
    %v1794 = vpack.c.b16 %v1662, %v1660
    %v1795 = vpack.c.b16 %v1663, %v1661
    %v1796 = vpack.c.b16 %v1666, %v1664
    %v1797 = vpack.c.b16 %v1667, %v1665
    %v1798 = vpack.c.b16 %v1670, %v1668
    %v1799 = vpack.c.b16 %v1671, %v1669
    %v1800 = vpack.c.b16 %v1674, %v1672
    %v1801 = vpack.c.b16 %v1675, %v1673
    %v1802 = vpack.c.b16 %v1678, %v1676
    %v1803 = vpack.c.b16 %v1679, %v1677
    %v1804 = vpack.c.b16 %v1682, %v1680
    %v1805 = vpack.c.b16 %v1683, %v1681
    %v1806 = vpack.c.b16 %v1686, %v1684
    %v1807 = vpack.c.b16 %v1687, %v1685
    %v1808 = vpack.c.b16 %v1690, %v1688
    %v1809 = vpack.c.b16 %v1691, %v1689
    %v1810 = vpack.c.b16 %v1694, %v1692
    %v1811 = vpack.c.b16 %v1695, %v1693
    %v1812 = vpack.c.b16 %v1698, %v1696
    %v1813 = vpack.c.b16 %v1699, %v1697
    %v1814 = vpack.c.b16 %v1702, %v1700
    %v1815 = vpack.c.b16 %v1703, %v1701
    %v1816 = vpack.c.b16 %v1706, %v1704
    %v1817 = vpack.c.b16 %v1707, %v1705
    %v1818 = vpack.c.b16 %v1710, %v1708
    %v1819 = vpack.c.b16 %v1711, %v1709
    %v1820 = vpack.c.b16 %v1714, %v1712
    %v1821 = vpack.c.b16 %v1715, %v1713
    %v1822 = vpack.c.b16 %v1718, %v1716
    %v1823 = vpack.c.b16 %v1719, %v1717
    %v1824 = vpack.c.b16 %v1722, %v1720
    %v1825 = vpack.c.b16 %v1723, %v1721
    %v1826 = vpack.c.b16 %v1726, %v1724
    %v1827 = vpack.c.b16 %v1727, %v1725
    %v1828 = vpack.c.b16 %v1730, %v1728
    %v1829 = vpack.c.b16 %v1731, %v1729
    %v1830 = vpack.c.b16 %v1734, %v1732
    %v1831 = vpack.c.b16 %v1735, %v1733
    %1928 = vmatprep.subr.bf16.mxu0 %v1751
    %1929 = vmatpush1.bf16.msra.mxu0 %v1750
    %1930 = vmatprep.subr.bf16.mxu0 %v1749
    %1931 = vmatpush1.bf16.msra.mxu0 %v1748
    %1932 = vmatprep.subr.bf16.mxu0 %v1747
    %1933 = vmatpush1.bf16.msra.mxu0 %v1746
    %1934 = vmatprep.subr.bf16.mxu0 %v1745
    %1935 = vmatpush1.bf16.msra.mxu0 %v1744
    %1936 = vmatprep.subr.bf16.mxu0 %v1743
    %1937 = vmatpush1.bf16.msra.mxu0 %v1742
    %1938 = vmatprep.subr.bf16.mxu0 %v1741
    %1939 = vmatpush1.bf16.msra.mxu0 %v1740
    %1940 = vmatprep.subr.bf16.mxu0 %v1739
    %1941 = vmatpush1.bf16.msra.mxu0 %v1738
    %1942 = vmatprep.subr.bf16.mxu0 %v1737
    %1943 = vmatpush1.bf16.msra.mxu0 %v1736
    %1944 = vmatprep.subr.bf16.mxu0 %v1767
    %1945 = vmatpush2.bf16.msra.mxu0 %v1766
    %1946 = vmatprep.subr.bf16.mxu0 %v1765
    %1947 = vmatpush2.bf16.msra.mxu0 %v1764
    %1948 = vmatprep.subr.bf16.mxu0 %v1763
    %1949 = vmatpush2.bf16.msra.mxu0 %v1762
    %1950 = vmatprep.subr.bf16.mxu0 %v1761
    %1951 = vmatpush2.bf16.msra.mxu0 %v1760
    %1952 = vmatprep.subr.bf16.mxu0 %v1759
    %1953 = vmatpush2.bf16.msra.mxu0 %v1758
    %1954 = vmatprep.subr.bf16.mxu0 %v1757
    %1955 = vmatpush2.bf16.msra.mxu0 %v1756
    %1956 = vmatprep.subr.bf16.mxu0 %v1755
    %1957 = vmatpush2.bf16.msra.mxu0 %v1754
    %1958 = vmatprep.subr.bf16.mxu0 %v1753
    %1959 = vmatpush2.bf16.msra.mxu0 %v1752
    %1960 = vmatprep.mubr.bf16.mxu0 %v158
    %1961 = vmatmul.mubr.bf16.gmra.mxu0 %v157
    %v1962 = vpop.f32.mrf.mxu0
    %v1963 = vadd.f32 %v1441, %v1962
    %v1964 = vpop.f32.mrf.mxu0
    %v1965 = vadd.f32 %v1445, %v1964
    %v1966 = vpop.f32.mrf.mxu0
    %v1967 = vpop.f32.mrf.mxu0
    %1968 = vdwg.mxu0
    %1969 = vmatprep.subr.bf16.mxu0 %v1783
    %1970 = vmatpush1.bf16.msra.mxu0 %v1782
    %1971 = vmatprep.subr.bf16.mxu0 %v1781
    %1972 = vmatpush1.bf16.msra.mxu0 %v1780
    %1973 = vmatprep.subr.bf16.mxu0 %v1779
    %1974 = vmatpush1.bf16.msra.mxu0 %v1778
    %1975 = vmatprep.subr.bf16.mxu0 %v1777
    %1976 = vmatpush1.bf16.msra.mxu0 %v1776
    %1977 = vmatprep.subr.bf16.mxu0 %v1775
    %1978 = vmatpush1.bf16.msra.mxu0 %v1774
    %1979 = vmatprep.subr.bf16.mxu0 %v1773
    %1980 = vmatpush1.bf16.msra.mxu0 %v1772
    %1981 = vmatprep.subr.bf16.mxu0 %v1771
    %1982 = vmatpush1.bf16.msra.mxu0 %v1770
    %1983 = vmatprep.subr.bf16.mxu0 %v1769
    %1984 = vmatpush1.bf16.msra.mxu0 %v1768
    %1985 = vmatprep.subr.bf16.mxu0 %v1799
    %1986 = vmatpush2.bf16.msra.mxu0 %v1798
    %1987 = vmatprep.subr.bf16.mxu0 %v1797
    %1988 = vmatpush2.bf16.msra.mxu0 %v1796
    %1989 = vmatprep.subr.bf16.mxu0 %v1795
    %1990 = vmatpush2.bf16.msra.mxu0 %v1794
    %1991 = vmatprep.subr.bf16.mxu0 %v1793
    %1992 = vmatpush2.bf16.msra.mxu0 %v1792
    %1993 = vmatprep.subr.bf16.mxu0 %v1791
    %1994 = vmatpush2.bf16.msra.mxu0 %v1790
    %1995 = vmatprep.subr.bf16.mxu0 %v1789
    %1996 = vmatpush2.bf16.msra.mxu0 %v1788
    %1997 = vmatprep.subr.bf16.mxu0 %v1787
    %1998 = vmatpush2.bf16.msra.mxu0 %v1786
    %1999 = vmatprep.subr.bf16.mxu0 %v1785
    %2000 = vmatpush2.bf16.msra.mxu0 %v1784
    %2001 = vmatprep.mubr.bf16.mxu0 %v160
    %2002 = vmatmul.mubr.bf16.gmra.mxu0 %v159
    %v2003 = vpop.f32.mrf.mxu0
    %v2004 = vadd.f32 %v1963, %v2003
    %v2005 = vpop.f32.mrf.mxu0
    %v2006 = vadd.f32 %v1965, %v2005
    %v2007 = vpop.f32.mrf.mxu0
    %v2008 = vpop.f32.mrf.mxu0
    %2009 = vdwg.mxu0
    %2010 = vmatprep.subr.bf16.mxu0 %v1815
    %2011 = vmatpush1.bf16.msra.mxu0 %v1814
    %2012 = vmatprep.subr.bf16.mxu0 %v1813
    %2013 = vmatpush1.bf16.msra.mxu0 %v1812
    %2014 = vmatprep.subr.bf16.mxu0 %v1811
    %2015 = vmatpush1.bf16.msra.mxu0 %v1810
    %2016 = vmatprep.subr.bf16.mxu0 %v1809
    %2017 = vmatpush1.bf16.msra.mxu0 %v1808
    %2018 = vmatprep.subr.bf16.mxu0 %v1807
    %2019 = vmatpush1.bf16.msra.mxu0 %v1806
    %2020 = vmatprep.subr.bf16.mxu0 %v1805
    %2021 = vmatpush1.bf16.msra.mxu0 %v1804
    %2022 = vmatprep.subr.bf16.mxu0 %v1803
    %2023 = vmatpush1.bf16.msra.mxu0 %v1802
    %2024 = vmatprep.subr.bf16.mxu0 %v1801
    %2025 = vmatpush1.bf16.msra.mxu0 %v1800
    %2026 = vmatprep.subr.bf16.mxu0 %v1831
    %2027 = vmatpush2.bf16.msra.mxu0 %v1830
    %2028 = vmatprep.subr.bf16.mxu0 %v1829
    %2029 = vmatpush2.bf16.msra.mxu0 %v1828
    %2030 = vmatprep.subr.bf16.mxu0 %v1827
    %2031 = vmatpush2.bf16.msra.mxu0 %v1826
    %2032 = vmatprep.subr.bf16.mxu0 %v1825
    %2033 = vmatpush2.bf16.msra.mxu0 %v1824
    %2034 = vmatprep.subr.bf16.mxu0 %v1823
    %2035 = vmatpush2.bf16.msra.mxu0 %v1822
    %2036 = vmatprep.subr.bf16.mxu0 %v1821
    %2037 = vmatpush2.bf16.msra.mxu0 %v1820
    %2038 = vmatprep.subr.bf16.mxu0 %v1819
    %2039 = vmatpush2.bf16.msra.mxu0 %v1818
    %2040 = vmatprep.subr.bf16.mxu0 %v1817
    %2041 = vmatpush2.bf16.msra.mxu0 %v1816
    %2042 = vmatprep.mubr.bf16.mxu0 %v162
    %2043 = vmatmul.mubr.bf16.gmra.mxu0 %v161
    %v2044 = vpop.f32.mrf.mxu0
    %v2045 = vadd.f32 %v2004, %v2044
    %v2046 = vpop.f32.mrf.mxu0
    %v2047 = vadd.f32 %v2006, %v2046
    %v2048 = vpop.f32.mrf.mxu0
    %v2049 = vpop.f32.mrf.mxu0
    %2050 = vdwg.mxu0
    %v2051 = vtanh.pop %v1334
    %v2052 = vtanh.pop %v1336
    %v2053 = vtanh.pop %v2045
    %v2054 = vtanh.pop %v2047
    %v2055 = vpack.c.bf16 %v1334, %v1334
    %v2056 = vpack.c.bf16 %v1336, %v1336
    %v2057 = vld [vmem:[#allocation10] sm:$0xff]
    %v2058 = vld [vmem:[#allocation10 + $0x8] sm:$0xff]
    %v2059 = vld [vmem:[#allocation10 + $0x10] sm:$0xff]
    %v2060 = vld [vmem:[#allocation10 + $0x18] sm:$0xff]
    %v2061 = vld [vmem:[#allocation10 + $0x20] sm:$0xff]
    %v2062 = vld [vmem:[#allocation10 + $0x28] sm:$0xff]
    %v2063 = vld [vmem:[#allocation10 + $0x30] sm:$0xff]
    %v2064 = vld [vmem:[#allocation10 + $0x38] sm:$0xff]
    %v2065 = vld [vmem:[#allocation10 + $0x40] sm:$0xff]
    %v2066 = vld [vmem:[#allocation10 + $0x48] sm:$0xff]
    %v2067 = vld [vmem:[#allocation10 + $0x50] sm:$0xff]
    %v2068 = vld [vmem:[#allocation10 + $0x58] sm:$0xff]
    %v2069 = vld [vmem:[#allocation10 + $0x60] sm:$0xff]
    %v2070 = vld [vmem:[#allocation10 + $0x68] sm:$0xff]
    %v2071 = vld [vmem:[#allocation10 + $0x70] sm:$0xff]
    %v2072 = vld [vmem:[#allocation10 + $0x78] sm:$0xff]
    %v2073 = vld [vmem:[#allocation10 + $0x80] sm:$0xff]
    %v2074 = vld [vmem:[#allocation10 + $0x88] sm:$0xff]
    %v2075 = vld [vmem:[#allocation10 + $0x90] sm:$0xff]
    %v2076 = vld [vmem:[#allocation10 + $0x98] sm:$0xff]
    %v2077 = vld [vmem:[#allocation10 + $0xa0] sm:$0xff]
    %v2078 = vld [vmem:[#allocation10 + $0xa8] sm:$0xff]
    %v2079 = vld [vmem:[#allocation10 + $0xb0] sm:$0xff]
    %v2080 = vld [vmem:[#allocation10 + $0xb8] sm:$0xff]
    %v2081 = vld [vmem:[#allocation10 + $0xc0] sm:$0xff]
    %v2082 = vld [vmem:[#allocation10 + $0xc8] sm:$0xff]
    %v2083 = vld [vmem:[#allocation10 + $0xd0] sm:$0xff]
    %v2084 = vld [vmem:[#allocation10 + $0xd8] sm:$0xff]
    %v2085 = vld [vmem:[#allocation10 + $0xe0] sm:$0xff]
    %v2086 = vld [vmem:[#allocation10 + $0xe8] sm:$0xff]
    %v2087 = vld [vmem:[#allocation10 + $0xf0] sm:$0xff]
    %v2088 = vld [vmem:[#allocation10 + $0xf8] sm:$0xff]
    %v2089 = vpack.c.bf16 %v2045, %v2045
    %v2090 = vpack.c.bf16 %v2047, %v2047
    %v2091 = vld [vmem:[#allocation11] sm:$0xff]
    %v2092 = vld [vmem:[#allocation11 + $0x8] sm:$0xff]
    %v2093 = vld [vmem:[#allocation11 + $0x10] sm:$0xff]
    %v2094 = vld [vmem:[#allocation11 + $0x18] sm:$0xff]
    %v2095 = vld [vmem:[#allocation11 + $0x20] sm:$0xff]
    %v2096 = vld [vmem:[#allocation11 + $0x28] sm:$0xff]
    %v2097 = vld [vmem:[#allocation11 + $0x30] sm:$0xff]
    %v2098 = vld [vmem:[#allocation11 + $0x38] sm:$0xff]
    %v2099 = vld [vmem:[#allocation11 + $0x40] sm:$0xff]
    %v2100 = vld [vmem:[#allocation11 + $0x48] sm:$0xff]
    %v2101 = vld [vmem:[#allocation11 + $0x50] sm:$0xff]
    %v2102 = vld [vmem:[#allocation11 + $0x58] sm:$0xff]
    %v2103 = vld [vmem:[#allocation11 + $0x60] sm:$0xff]
    %v2104 = vld [vmem:[#allocation11 + $0x68] sm:$0xff]
    %v2105 = vld [vmem:[#allocation11 + $0x70] sm:$0xff]
    %v2106 = vld [vmem:[#allocation11 + $0x78] sm:$0xff]
    %v2107 = vld [vmem:[#allocation11 + $0x80] sm:$0xff]
    %v2108 = vld [vmem:[#allocation11 + $0x88] sm:$0xff]
    %v2109 = vld [vmem:[#allocation11 + $0x90] sm:$0xff]
    %v2110 = vld [vmem:[#allocation11 + $0x98] sm:$0xff]
    %v2111 = vld [vmem:[#allocation11 + $0xa0] sm:$0xff]
    %v2112 = vld [vmem:[#allocation11 + $0xa8] sm:$0xff]
    %v2113 = vld [vmem:[#allocation11 + $0xb0] sm:$0xff]
    %v2114 = vld [vmem:[#allocation11 + $0xb8] sm:$0xff]
    %v2115 = vld [vmem:[#allocation11 + $0xc0] sm:$0xff]
    %v2116 = vld [vmem:[#allocation11 + $0xc8] sm:$0xff]
    %v2117 = vld [vmem:[#allocation11 + $0xd0] sm:$0xff]
    %v2118 = vld [vmem:[#allocation11 + $0xd8] sm:$0xff]
    %v2119 = vld [vmem:[#allocation11 + $0xe0] sm:$0xff]
    %v2120 = vld [vmem:[#allocation11 + $0xe8] sm:$0xff]
    %v2121 = vld [vmem:[#allocation11 + $0xf0] sm:$0xff]
    %v2122 = vld [vmem:[#allocation11 + $0xf8] sm:$0xff]
    %v2155 = vunpack.c.l.b16 %v2091
    %v2156 = vunpack.c.h.b16 %v2091
    %v2157 = vunpack.c.l.b16 %v2092
    %v2158 = vunpack.c.h.b16 %v2092
    %v2159 = vunpack.c.l.b16 %v2093
    %v2160 = vunpack.c.h.b16 %v2093
    %v2161 = vunpack.c.l.b16 %v2094
    %v2162 = vunpack.c.h.b16 %v2094
    %v2163 = vunpack.c.l.b16 %v2095
    %v2164 = vunpack.c.h.b16 %v2095
    %v2165 = vunpack.c.l.b16 %v2096
    %v2166 = vunpack.c.h.b16 %v2096
    %v2167 = vunpack.c.l.b16 %v2097
    %v2168 = vunpack.c.h.b16 %v2097
    %v2169 = vunpack.c.l.b16 %v2098
    %v2170 = vunpack.c.h.b16 %v2098
    %v2171 = vunpack.c.l.b16 %v2099
    %v2172 = vunpack.c.h.b16 %v2099
    %v2173 = vunpack.c.l.b16 %v2100
    %v2174 = vunpack.c.h.b16 %v2100
    %v2175 = vunpack.c.l.b16 %v2101
    %v2176 = vunpack.c.h.b16 %v2101
    %v2177 = vunpack.c.l.b16 %v2102
    %v2178 = vunpack.c.h.b16 %v2102
    %v2179 = vunpack.c.l.b16 %v2103
    %v2180 = vunpack.c.h.b16 %v2103
    %v2181 = vunpack.c.l.b16 %v2104
    %v2182 = vunpack.c.h.b16 %v2104
    %v2183 = vunpack.c.l.b16 %v2105
    %v2184 = vunpack.c.h.b16 %v2105
    %v2185 = vunpack.c.l.b16 %v2106
    %v2186 = vunpack.c.h.b16 %v2106
    %v2187 = vunpack.c.l.b16 %v2107
    %v2188 = vunpack.c.h.b16 %v2107
    %v2189 = vunpack.c.l.b16 %v2108
    %v2190 = vunpack.c.h.b16 %v2108
    %v2191 = vunpack.c.l.b16 %v2109
    %v2192 = vunpack.c.h.b16 %v2109
    %v2193 = vunpack.c.l.b16 %v2110
    %v2194 = vunpack.c.h.b16 %v2110
    %v2195 = vunpack.c.l.b16 %v2111
    %v2196 = vunpack.c.h.b16 %v2111
    %v2197 = vunpack.c.l.b16 %v2112
    %v2198 = vunpack.c.h.b16 %v2112
    %v2199 = vunpack.c.l.b16 %v2113
    %v2200 = vunpack.c.h.b16 %v2113
    %v2201 = vunpack.c.l.b16 %v2114
    %v2202 = vunpack.c.h.b16 %v2114
    %v2203 = vunpack.c.l.b16 %v2115
    %v2204 = vunpack.c.h.b16 %v2115
    %v2205 = vunpack.c.l.b16 %v2116
    %v2206 = vunpack.c.h.b16 %v2116
    %v2207 = vunpack.c.l.b16 %v2117
    %v2208 = vunpack.c.h.b16 %v2117
    %v2209 = vunpack.c.l.b16 %v2118
    %v2210 = vunpack.c.h.b16 %v2118
    %v2211 = vunpack.c.l.b16 %v2119
    %v2212 = vunpack.c.h.b16 %v2119
    %v2213 = vunpack.c.l.b16 %v2120
    %v2214 = vunpack.c.h.b16 %v2120
    %v2215 = vunpack.c.l.b16 %v2121
    %v2216 = vunpack.c.h.b16 %v2121
    %v2217 = vunpack.c.l.b16 %v2122
    %v2218 = vunpack.c.h.b16 %v2122
    %v2219 = vpack.c.b16 %v2157, %v2155
    %v2220 = vpack.c.b16 %v2158, %v2156
    %v2221 = vpack.c.b16 %v2161, %v2159
    %v2222 = vpack.c.b16 %v2162, %v2160
    %v2223 = vpack.c.b16 %v2165, %v2163
    %v2224 = vpack.c.b16 %v2166, %v2164
    %v2225 = vpack.c.b16 %v2169, %v2167
    %v2226 = vpack.c.b16 %v2170, %v2168
    %v2227 = vpack.c.b16 %v2173, %v2171
    %v2228 = vpack.c.b16 %v2174, %v2172
    %v2229 = vpack.c.b16 %v2177, %v2175
    %v2230 = vpack.c.b16 %v2178, %v2176
    %v2231 = vpack.c.b16 %v2181, %v2179
    %v2232 = vpack.c.b16 %v2182, %v2180
    %v2233 = vpack.c.b16 %v2185, %v2183
    %v2234 = vpack.c.b16 %v2186, %v2184
    %v2235 = vpack.c.b16 %v2189, %v2187
    %v2236 = vpack.c.b16 %v2190, %v2188
    %v2237 = vpack.c.b16 %v2193, %v2191
    %v2238 = vpack.c.b16 %v2194, %v2192
    %v2239 = vpack.c.b16 %v2197, %v2195
    %v2240 = vpack.c.b16 %v2198, %v2196
    %v2241 = vpack.c.b16 %v2201, %v2199
    %v2242 = vpack.c.b16 %v2202, %v2200
    %v2243 = vpack.c.b16 %v2205, %v2203
    %v2244 = vpack.c.b16 %v2206, %v2204
    %v2245 = vpack.c.b16 %v2209, %v2207
    %v2246 = vpack.c.b16 %v2210, %v2208
    %v2247 = vpack.c.b16 %v2213, %v2211
    %v2248 = vpack.c.b16 %v2214, %v2212
    %v2249 = vpack.c.b16 %v2217, %v2215
    %v2250 = vpack.c.b16 %v2218, %v2216
    %2283 = vmatprep.subr.bf16.mxu0 %v2234
    %2284 = vmatpush1.bf16.msra.mxu0 %v2233
    %2285 = vmatprep.subr.bf16.mxu0 %v2232
    %2286 = vmatpush1.bf16.msra.mxu0 %v2231
    %2287 = vmatprep.subr.bf16.mxu0 %v2230
    %2288 = vmatpush1.bf16.msra.mxu0 %v2229
    %2289 = vmatprep.subr.bf16.mxu0 %v2228
    %2290 = vmatpush1.bf16.msra.mxu0 %v2227
    %2291 = vmatprep.subr.bf16.mxu0 %v2226
    %2292 = vmatpush1.bf16.msra.mxu0 %v2225
    %2293 = vmatprep.subr.bf16.mxu0 %v2224
    %2294 = vmatpush1.bf16.msra.mxu0 %v2223
    %2295 = vmatprep.subr.bf16.mxu0 %v2222
    %2296 = vmatpush1.bf16.msra.mxu0 %v2221
    %2297 = vmatprep.subr.bf16.mxu0 %v2220
    %2298 = vmatpush1.bf16.msra.mxu0 %v2219
    %2299 = vmatprep.subr.bf16.mxu0 %v2250
    %2300 = vmatpush2.bf16.msra.mxu0 %v2249
    %2301 = vmatprep.subr.bf16.mxu0 %v2248
    %2302 = vmatpush2.bf16.msra.mxu0 %v2247
    %2303 = vmatprep.subr.bf16.mxu0 %v2246
    %2304 = vmatpush2.bf16.msra.mxu0 %v2245
    %2305 = vmatprep.subr.bf16.mxu0 %v2244
    %2306 = vmatpush2.bf16.msra.mxu0 %v2243
    %2307 = vmatprep.subr.bf16.mxu0 %v2242
    %2308 = vmatpush2.bf16.msra.mxu0 %v2241
    %2309 = vmatprep.subr.bf16.mxu0 %v2240
    %2310 = vmatpush2.bf16.msra.mxu0 %v2239
    %2311 = vmatprep.subr.bf16.mxu0 %v2238
    %2312 = vmatpush2.bf16.msra.mxu0 %v2237
    %2313 = vmatprep.subr.bf16.mxu0 %v2236
    %2314 = vmatpush2.bf16.msra.mxu0 %v2235
    %2315 = vmatprep.mubr.bf16.mxu0 %v2090
    %2316 = vmatmul.mubr.bf16.gmra.mxu0 %v2089
    %v2317 = vpop.f32.mrf.mxu0
    %v2318 = vadd.f32 0.0, %v2317
    %v2319 = vpop.f32.mrf.mxu0
    %v2320 = vadd.f32 0.0, %v2319
    %v2321 = vpop.f32.mrf.mxu0
    %v2322 = vpop.f32.mrf.mxu0
    %2323 = vdwg.mxu0
    %v2356 = vunpack.c.l.b16 %v2057
    %v2357 = vunpack.c.h.b16 %v2057
    %v2358 = vunpack.c.l.b16 %v2058
    %v2359 = vunpack.c.h.b16 %v2058
    %v2360 = vunpack.c.l.b16 %v2059
    %v2361 = vunpack.c.h.b16 %v2059
    %v2362 = vunpack.c.l.b16 %v2060
    %v2363 = vunpack.c.h.b16 %v2060
    %v2364 = vunpack.c.l.b16 %v2061
    %v2365 = vunpack.c.h.b16 %v2061
    %v2366 = vunpack.c.l.b16 %v2062
    %v2367 = vunpack.c.h.b16 %v2062
    %v2368 = vunpack.c.l.b16 %v2063
    %v2369 = vunpack.c.h.b16 %v2063
    %v2370 = vunpack.c.l.b16 %v2064
    %v2371 = vunpack.c.h.b16 %v2064
    %v2372 = vunpack.c.l.b16 %v2065
    %v2373 = vunpack.c.h.b16 %v2065
    %v2374 = vunpack.c.l.b16 %v2066
    %v2375 = vunpack.c.h.b16 %v2066
    %v2376 = vunpack.c.l.b16 %v2067
    %v2377 = vunpack.c.h.b16 %v2067
    %v2378 = vunpack.c.l.b16 %v2068
    %v2379 = vunpack.c.h.b16 %v2068
    %v2380 = vunpack.c.l.b16 %v2069
    %v2381 = vunpack.c.h.b16 %v2069
    %v2382 = vunpack.c.l.b16 %v2070
    %v2383 = vunpack.c.h.b16 %v2070
    %v2384 = vunpack.c.l.b16 %v2071
    %v2385 = vunpack.c.h.b16 %v2071
    %v2386 = vunpack.c.l.b16 %v2072
    %v2387 = vunpack.c.h.b16 %v2072
    %v2388 = vunpack.c.l.b16 %v2073
    %v2389 = vunpack.c.h.b16 %v2073
    %v2390 = vunpack.c.l.b16 %v2074
    %v2391 = vunpack.c.h.b16 %v2074
    %v2392 = vunpack.c.l.b16 %v2075
    %v2393 = vunpack.c.h.b16 %v2075
    %v2394 = vunpack.c.l.b16 %v2076
    %v2395 = vunpack.c.h.b16 %v2076
    %v2396 = vunpack.c.l.b16 %v2077
    %v2397 = vunpack.c.h.b16 %v2077
    %v2398 = vunpack.c.l.b16 %v2078
    %v2399 = vunpack.c.h.b16 %v2078
    %v2400 = vunpack.c.l.b16 %v2079
    %v2401 = vunpack.c.h.b16 %v2079
    %v2402 = vunpack.c.l.b16 %v2080
    %v2403 = vunpack.c.h.b16 %v2080
    %v2404 = vunpack.c.l.b16 %v2081
    %v2405 = vunpack.c.h.b16 %v2081
    %v2406 = vunpack.c.l.b16 %v2082
    %v2407 = vunpack.c.h.b16 %v2082
    %v2408 = vunpack.c.l.b16 %v2083
    %v2409 = vunpack.c.h.b16 %v2083
    %v2410 = vunpack.c.l.b16 %v2084
    %v2411 = vunpack.c.h.b16 %v2084
    %v2412 = vunpack.c.l.b16 %v2085
    %v2413 = vunpack.c.h.b16 %v2085
    %v2414 = vunpack.c.l.b16 %v2086
    %v2415 = vunpack.c.h.b16 %v2086
    %v2416 = vunpack.c.l.b16 %v2087
    %v2417 = vunpack.c.h.b16 %v2087
    %v2418 = vunpack.c.l.b16 %v2088
    %v2419 = vunpack.c.h.b16 %v2088
    %v2420 = vpack.c.b16 %v2358, %v2356
    %v2421 = vpack.c.b16 %v2359, %v2357
    %v2422 = vpack.c.b16 %v2362, %v2360
    %v2423 = vpack.c.b16 %v2363, %v2361
    %v2424 = vpack.c.b16 %v2366, %v2364
    %v2425 = vpack.c.b16 %v2367, %v2365
    %v2426 = vpack.c.b16 %v2370, %v2368
    %v2427 = vpack.c.b16 %v2371, %v2369
    %v2428 = vpack.c.b16 %v2374, %v2372
    %v2429 = vpack.c.b16 %v2375, %v2373
    %v2430 = vpack.c.b16 %v2378, %v2376
    %v2431 = vpack.c.b16 %v2379, %v2377
    %v2432 = vpack.c.b16 %v2382, %v2380
    %v2433 = vpack.c.b16 %v2383, %v2381
    %v2434 = vpack.c.b16 %v2386, %v2384
    %v2435 = vpack.c.b16 %v2387, %v2385
    %v2436 = vpack.c.b16 %v2390, %v2388
    %v2437 = vpack.c.b16 %v2391, %v2389
    %v2438 = vpack.c.b16 %v2394, %v2392
    %v2439 = vpack.c.b16 %v2395, %v2393
    %v2440 = vpack.c.b16 %v2398, %v2396
    %v2441 = vpack.c.b16 %v2399, %v2397
    %v2442 = vpack.c.b16 %v2402, %v2400
    %v2443 = vpack.c.b16 %v2403, %v2401
    %v2444 = vpack.c.b16 %v2406, %v2404
    %v2445 = vpack.c.b16 %v2407, %v2405
    %v2446 = vpack.c.b16 %v2410, %v2408
    %v2447 = vpack.c.b16 %v2411, %v2409
    %v2448 = vpack.c.b16 %v2414, %v2412
    %v2449 = vpack.c.b16 %v2415, %v2413
    %v2450 = vpack.c.b16 %v2418, %v2416
    %v2451 = vpack.c.b16 %v2419, %v2417
    %2484 = vmatprep.subr.bf16.mxu0 %v2435
    %2485 = vmatpush1.bf16.msra.mxu0 %v2434
    %2486 = vmatprep.subr.bf16.mxu0 %v2433
    %2487 = vmatpush1.bf16.msra.mxu0 %v2432
    %2488 = vmatprep.subr.bf16.mxu0 %v2431
    %2489 = vmatpush1.bf16.msra.mxu0 %v2430
    %2490 = vmatprep.subr.bf16.mxu0 %v2429
    %2491 = vmatpush1.bf16.msra.mxu0 %v2428
    %2492 = vmatprep.subr.bf16.mxu0 %v2427
    %2493 = vmatpush1.bf16.msra.mxu0 %v2426
    %2494 = vmatprep.subr.bf16.mxu0 %v2425
    %2495 = vmatpush1.bf16.msra.mxu0 %v2424
    %2496 = vmatprep.subr.bf16.mxu0 %v2423
    %2497 = vmatpush1.bf16.msra.mxu0 %v2422
    %2498 = vmatprep.subr.bf16.mxu0 %v2421
    %2499 = vmatpush1.bf16.msra.mxu0 %v2420
    %2500 = vmatprep.subr.bf16.mxu0 %v2451
    %2501 = vmatpush2.bf16.msra.mxu0 %v2450
    %2502 = vmatprep.subr.bf16.mxu0 %v2449
    %2503 = vmatpush2.bf16.msra.mxu0 %v2448
    %2504 = vmatprep.subr.bf16.mxu0 %v2447
    %2505 = vmatpush2.bf16.msra.mxu0 %v2446
    %2506 = vmatprep.subr.bf16.mxu0 %v2445
    %2507 = vmatpush2.bf16.msra.mxu0 %v2444
    %2508 = vmatprep.subr.bf16.mxu0 %v2443
    %2509 = vmatpush2.bf16.msra.mxu0 %v2442
    %2510 = vmatprep.subr.bf16.mxu0 %v2441
    %2511 = vmatpush2.bf16.msra.mxu0 %v2440
    %2512 = vmatprep.subr.bf16.mxu0 %v2439
    %2513 = vmatpush2.bf16.msra.mxu0 %v2438
    %2514 = vmatprep.subr.bf16.mxu0 %v2437
    %2515 = vmatpush2.bf16.msra.mxu0 %v2436
    %2516 = vmatprep.mubr.bf16.mxu0 %v2056
    %2517 = vmatmul.mubr.bf16.gmra.mxu0 %v2055
    %v2518 = vpop.f32.mrf.mxu0
    %v2519 = vadd.f32 %v2318, %v2518
    %v2520 = vpop.f32.mrf.mxu0
    %v2521 = vadd.f32 %v2320, %v2520
    %v2522 = vpop.f32.mrf.mxu0
    %v2523 = vpop.f32.mrf.mxu0
    %2524 = vdwg.mxu0
    %v2525 = vld [vmem:[%s8] sm:$0x3]
    %v2527 = vlaneseq
    %v2528 = vshrl.u32 %v2527, 7
    %v2529 = vsub.s32 0, %v2528
    %v2530 = vrot.slane %v2525, %v2529
    %v2531 = vlaneseq
    %v2532 = vshrl.u32 %v2531, 7
    %v2533 = vsub.s32 1, %v2532
    %v2534 = vrot.slane %v2525, %v2533
    %v2537 = vadd.f32 %v2519, %v2530
    %v2538 = vadd.f32 %v2521, %v2534
    %v2539 = vmax.f32 %v2537, %v2538
    %2540 = vmax.xlane.f32.xlu0 %v2539
    %v2541 = vpop.xlane.xlu0 %2540
    %v2542 = vsub.f32 %v2537, %v2541
    %v2543 = vsub.f32 %v2538, %v2541
    %v2544 = vmul.f32 %v2542, 1.442695
    %v2545 = vpow.pop %v2544
    %v2546 = vmul.f32 %v2543, 1.442695
    %v2547 = vpow.pop %v2546
    %v2548 = vadd.f32 %v2545, %v2547
    %2549 = vadd.xlane.f32.xlu0 %v2548
    %v2550 = vpop.xlane.xlu0 %2549
    %v2551 = vrcp.pop %v2550
    %v2552 = vmul.f32 %v2545, %v2551
    %v2553 = vmul.f32 %v2547, %v2551
    %v2554 = vsub.f32 %v2051, %v2053
    %v2555 = vsub.f32 %v2052, %v2054
    %v2556 = vmul.f32 %v2552, %v2554
    %v2557 = vmul.f32 %v2553, %v2555
    %v2558 = vadd.f32 %v2053, %v2556
    %v2559 = vadd.f32 %v2054, %v2557
    %v2560 = vpack.c.bf16 %v2558, %v2558
    %v2561 = vpack.c.bf16 %v2559, %v2559
    %v2562 = vld [vmem:[#allocation13] sm:$0xf]
    %v2563 = vld [vmem:[#allocation13 + $0x4] sm:$0xf]
    %v2564 = vld [vmem:[#allocation13 + $0x8] sm:$0xf]
    %v2565 = vld [vmem:[#allocation13 + $0xc] sm:$0xf]
    %v2566 = vld [vmem:[#allocation13 + $0x10] sm:$0xf]
    %v2567 = vld [vmem:[#allocation13 + $0x14] sm:$0xf]
    %v2568 = vld [vmem:[#allocation13 + $0x18] sm:$0xf]
    %v2569 = vld [vmem:[#allocation13 + $0x1c] sm:$0xf]
    %v2570 = vld [vmem:[#allocation13 + $0x20] sm:$0xf]
    %v2571 = vld [vmem:[#allocation13 + $0x24] sm:$0xf]
    %v2572 = vld [vmem:[#allocation13 + $0x28] sm:$0xf]
    %v2573 = vld [vmem:[#allocation13 + $0x2c] sm:$0xf]
    %v2574 = vld [vmem:[#allocation13 + $0x30] sm:$0xf]
    %v2575 = vld [vmem:[#allocation13 + $0x34] sm:$0xf]
    %v2576 = vld [vmem:[#allocation13 + $0x38] sm:$0xf]
    %v2577 = vld [vmem:[#allocation13 + $0x3c] sm:$0xf]
    %v2578 = vld [vmem:[#allocation13 + $0x40] sm:$0xf]
    %v2579 = vld [vmem:[#allocation13 + $0x44] sm:$0xf]
    %v2580 = vld [vmem:[#allocation13 + $0x48] sm:$0xf]
    %v2581 = vld [vmem:[#allocation13 + $0x4c] sm:$0xf]
    %v2582 = vld [vmem:[#allocation13 + $0x50] sm:$0xf]
    %v2583 = vld [vmem:[#allocation13 + $0x54] sm:$0xf]
    %v2584 = vld [vmem:[#allocation13 + $0x58] sm:$0xf]
    %v2585 = vld [vmem:[#allocation13 + $0x5c] sm:$0xf]
    %v2586 = vld [vmem:[#allocation13 + $0x60] sm:$0xf]
    %v2587 = vld [vmem:[#allocation13 + $0x64] sm:$0xf]
    %v2588 = vld [vmem:[#allocation13 + $0x68] sm:$0xf]
    %v2589 = vld [vmem:[#allocation13 + $0x6c] sm:$0xf]
    %v2590 = vld [vmem:[#allocation13 + $0x70] sm:$0xf]
    %v2591 = vld [vmem:[#allocation13 + $0x74] sm:$0xf]
    %v2592 = vld [vmem:[#allocation13 + $0x78] sm:$0xf]
    %v2593 = vld [vmem:[#allocation13 + $0x7c] sm:$0xf]
    %v2594 = vld [vmem:[%s10] sm:$0x1]
    %v2596 = vlaneseq
    %v2597 = vshrl.u32 %v2596, 7
    %v2598 = vsub.s32 0, %v2597
    %v2599 = vrot.slane %v2594, %v2598
    %v2633 = vunpack.c.l.b16 %v2562
    %v2634 = vunpack.c.l.b16 %v2563
    %v2635 = vunpack.c.l.b16 %v2564
    %v2636 = vunpack.c.l.b16 %v2565
    %v2637 = vunpack.c.l.b16 %v2566
    %v2638 = vunpack.c.l.b16 %v2567
    %v2639 = vunpack.c.l.b16 %v2568
    %v2640 = vunpack.c.l.b16 %v2569
    %v2641 = vunpack.c.l.b16 %v2570
    %v2642 = vunpack.c.l.b16 %v2571
    %v2643 = vunpack.c.l.b16 %v2572
    %v2644 = vunpack.c.l.b16 %v2573
    %v2645 = vunpack.c.l.b16 %v2574
    %v2646 = vunpack.c.l.b16 %v2575
    %v2647 = vunpack.c.l.b16 %v2576
    %v2648 = vunpack.c.l.b16 %v2577
    %v2649 = vunpack.c.l.b16 %v2578
    %v2650 = vunpack.c.l.b16 %v2579
    %v2651 = vunpack.c.l.b16 %v2580
    %v2652 = vunpack.c.l.b16 %v2581
    %v2653 = vunpack.c.l.b16 %v2582
    %v2654 = vunpack.c.l.b16 %v2583
    %v2655 = vunpack.c.l.b16 %v2584
    %v2656 = vunpack.c.l.b16 %v2585
    %v2657 = vunpack.c.l.b16 %v2586
    %v2658 = vunpack.c.l.b16 %v2587
    %v2659 = vunpack.c.l.b16 %v2588
    %v2660 = vunpack.c.l.b16 %v2589
    %v2661 = vunpack.c.l.b16 %v2590
    %v2662 = vunpack.c.l.b16 %v2591
    %v2663 = vunpack.c.l.b16 %v2592
    %v2664 = vunpack.c.l.b16 %v2593
    %v2665 = vpack.c.b16 %v2634, %v2633
    %v2666 = vpack.c.b16 %v2636, %v2635
    %v2667 = vpack.c.b16 %v2638, %v2637
    %v2668 = vpack.c.b16 %v2640, %v2639
    %v2669 = vpack.c.b16 %v2642, %v2641
    %v2670 = vpack.c.b16 %v2644, %v2643
    %v2671 = vpack.c.b16 %v2646, %v2645
    %v2672 = vpack.c.b16 %v2648, %v2647
    %v2673 = vpack.c.b16 %v2650, %v2649
    %v2674 = vpack.c.b16 %v2652, %v2651
    %v2675 = vpack.c.b16 %v2654, %v2653
    %v2676 = vpack.c.b16 %v2656, %v2655
    %v2677 = vpack.c.b16 %v2658, %v2657
    %v2678 = vpack.c.b16 %v2660, %v2659
    %v2679 = vpack.c.b16 %v2662, %v2661
    %v2680 = vpack.c.b16 %v2664, %v2663
    %2697 = vmatprep.subr.bf16.mxu0 0
    %2698 = vmatpush1.bf16.msra.mxu0 %v2672
    %2699 = vmatprep.subr.bf16.mxu0 0
    %2700 = vmatpush1.bf16.msra.mxu0 %v2671
    %2701 = vmatprep.subr.bf16.mxu0 0
    %2702 = vmatpush1.bf16.msra.mxu0 %v2670
    %2703 = vmatprep.subr.bf16.mxu0 0
    %2704 = vmatpush1.bf16.msra.mxu0 %v2669
    %2705 = vmatprep.subr.bf16.mxu0 0
    %2706 = vmatpush1.bf16.msra.mxu0 %v2668
    %2707 = vmatprep.subr.bf16.mxu0 0
    %2708 = vmatpush1.bf16.msra.mxu0 %v2667
    %2709 = vmatprep.subr.bf16.mxu0 0
    %2710 = vmatpush1.bf16.msra.mxu0 %v2666
    %2711 = vmatprep.subr.bf16.mxu0 0
    %2712 = vmatpush1.bf16.msra.mxu0 %v2665
    %2713 = vmatprep.subr.bf16.mxu0 0
    %2714 = vmatpush2.bf16.msra.mxu0 %v2680
    %2715 = vmatprep.subr.bf16.mxu0 0
    %2716 = vmatpush2.bf16.msra.mxu0 %v2679
    %2717 = vmatprep.subr.bf16.mxu0 0
    %2718 = vmatpush2.bf16.msra.mxu0 %v2678
    %2719 = vmatprep.subr.bf16.mxu0 0
    %2720 = vmatpush2.bf16.msra.mxu0 %v2677
    %2721 = vmatprep.subr.bf16.mxu0 0
    %2722 = vmatpush2.bf16.msra.mxu0 %v2676
    %2723 = vmatprep.subr.bf16.mxu0 0
    %2724 = vmatpush2.bf16.msra.mxu0 %v2675
    %2725 = vmatprep.subr.bf16.mxu0 0
    %2726 = vmatpush2.bf16.msra.mxu0 %v2674
    %2727 = vmatprep.subr.bf16.mxu0 0
    %2728 = vmatpush2.bf16.msra.mxu0 %v2673
    %2729 = vmatprep.mubr.bf16.mxu0 %v2561
    %2730 = vmatmul.mubr.bf16.gmra.mxu0 %v2560
    %v2731 = vpop.f32.mrf.mxu0
    %v2732 = vadd.f32 %v2599, %v2731
    %v2733 = vpop.f32.mrf.mxu0
    %v2734 = vpop.f32.mrf.mxu0
    %v2735 = vpop.f32.mrf.mxu0
    %2736 = vdwg.mxu0
    %2737 = vst [vmem:[#allocation14] sm:$0xff] %v2732
    // Predicated region
    $region74: #{tpu_custom_call.1} parent=1 // pred_check
      _
    $region75: #{tpu_custom_call.1} parent=1 // pred_check_branch
      %2739 = sbr.rel (0) target = $region77
    $region76: #{tpu_custom_call.1} parent=1 // pred_region
      %s2741 = ssub.s32 128, 128
      %2742 = vsyncadd [#allocation4], %s2741
      %s2744 = sshll.u32 [#allocation14], 4
      %s2745 = int_to_ptr.vmem [resolvable:$true] %s2744
      %2747 = dma.vmem_to_hbm [thread:$0]  %s2745, 128, %s11, [#allocation4]
    $region77: #{tpu_custom_call.1} parent=1 // pred_fallthru
      _
    // Predicated region
    $region78: #{tpu_custom_call.1} parent=1 // pred_check
      _
    $region79: #{tpu_custom_call.1} parent=1 // pred_check_branch
      %2749 = sbr.rel (0) target = $region81
    $region80: #{tpu_custom_call.1} parent=1 // pred_region
      %2750 = dma.done [#allocation4], 128
    $region81: #{tpu_custom_call.1} parent=1 // pred_fallthru
      _
    %2751 = vsyncpa [#allocation3], 1
    %2752 = vsyncpa [#allocation6], 1
    %2753 = vsyncpa [#allocation9], 1
    %2754 = vsyncpa [#allocation12], 1
    %2755 = vsyncpa [#allocation4], 1

</llo_original>
